<compile_context>
chip_gen: v7x
topology: tpu7x:2x2x1
jax: 0.10.0
libtpu: 0.0.40
codegen_flags: <defaults>
</compile_context>

<pallas_src>
import jax
import jax.numpy as jnp
import numpy as np
from jax.experimental import pallas as pl
from jax.experimental.pallas import tpu as pltpu

NEG_SLOPE = 0.01          # nn.LeakyReLU default
EPS = 1e-8
HIDDEN = 32
BIAS_COL = 32             # column of the packed slab that holds biases
SLAB_COLS = 128           # lane-width of the packed parameter slab
LANE = 128
MAX_TB = 4096             # max lanes per batch tile (VMEM use stays < a few MiB)
MXU_DTYPE = jnp.bfloat16  # operand dtype for the 32-wide MXU dots (f32 accumulate)


def _build_layout():
    """Row layout of the packed parameter slab. Each block starts on a multiple of 8."""
    layout = {}
    row = 0
    for name, out_d, in_d in [
        ("bc_r", 3, 3), ("bc_l1", HIDDEN, 6), ("bc_l2", HIDDEN, HIDDEN),
        ("bc_d1", HIDDEN, HIDDEN), ("bc_d2", 6, HIDDEN),
        ("ae_r", 3, 3), ("ae_l1", HIDDEN, 3), ("ae_l2", HIDDEN, HIDDEN),
        ("ae_d1", HIDDEN, HIDDEN), ("ae_d2", 3, HIDDEN),
        ("ae_bias", 3, 0),
    ]:
        layout[name] = (row, out_d, in_d)
        row += ((out_d + 7) // 8) * 8
    return layout, row


LAYOUT, SLAB_ROWS = _build_layout()      # SLAB_ROWS == 232


def _leaky(x):
    return jnp.where(x >= 0, x, NEG_SLOPE * x)


def _dense(p_ref, name, x, k=None):
    """y = W @ x + b on the MXU.  W:[out, k] (PyTorch [out,in]; extra columns are
    zero in the slab), x:[k, TB], bias:[out, 1].  bf16 operands, f32 accumulate."""
    row, out_d, in_d = LAYOUT[name]
    kk = in_d if k is None else k
    W = p_ref[row:row + out_d, 0:kk]
    b = p_ref[row:row + out_d, BIAS_COL:BIAS_COL + 1]
    y = jnp.dot(W.astype(MXU_DTYPE), x.astype(MXU_DTYPE),
                preferred_element_type=jnp.float32)
    return y + b


def _recode(p_ref, name, x):
    """Tiny 3x3 Linear done on the VPU as broadcast FMAs (keeps the MXU free)."""
    row, _, _ = LAYOUT[name]
    b = p_ref[row:row + 3, BIAS_COL:BIAS_COL + 1]               # [3, 1]
    return (b
            + p_ref[row:row + 3, 0:1] * x[0:1]
            + p_ref[row:row + 3, 1:2] * x[1:2]
            + p_ref[row:row + 3, 2:3] * x[2:3])                 # [3, TB]


def mnn_kernel(sc_ref, p_ref, in_ref, out_ref, feat_ref):
    z0 = sc_ref[0]                     # SMEM scalar
    dt = sc_ref[1]                     # SMEM scalar

    xin = in_ref[...]                  # [8, TB]  (rows: vx,vy,vz,wx,wy,wz,b,pad)
    v = xin[0:3]                       # [3, TB]
    w = xin[3:6]                       # [3, TB]
    bpos = xin[6:7]                    # [1, TB]
    vz = v[2:3]

    tb = feat_ref.shape[1]
    # pad rows of the feature scratch only ever hit zero weight columns, but must
    # stay finite (0 * NaN = NaN), so keep them zeroed.
    feat_ref[6:8, :] = jnp.zeros((2, tb), jnp.float32)

    # ================= BounceModel =================
    wr = _recode(p_ref, "bc_r", w)                              # [3, TB]

    # gram_schmidth_2d on v[:2], wr[:2] — component-grouped [2, TB] math
    v2 = v[0:2]
    w2 = wr[0:2]
    vn2 = jnp.sqrt(jnp.sum(v2 * v2, axis=0, keepdims=True))
    v_on = v2 * pl.reciprocal(vn2 + EPS, approx=True)           # [2, TB]
    proj = jnp.sum(w2 * v_on, axis=0, keepdims=True)
    w_o = w2 - proj * v_on
    wn2 = jnp.sqrt(jnp.sum(w_o * w_o, axis=0, keepdims=True))
    w_on = w_o * pl.reciprocal(wn2 + EPS, approx=True)          # [2, TB]
    det = v_on[0:1] * w_on[1:2] - v_on[1:2] * w_on[0:1]
    w_on = jnp.where(det < 0, -w_on, w_on)

    # local (rotated) coords, scaled, written straight into the feature scratch
    feat_ref[0:1, :] = jnp.sum(v_on * v2, axis=0, keepdims=True) * (1.0 / 3.0)
    feat_ref[1:2, :] = jnp.sum(w_on * v2, axis=0, keepdims=True) * (1.0 / 3.0)
    feat_ref[2:3, :] = vz * (1.0 / 3.0)
    feat_ref[3:4, :] = jnp.sum(v_on * w2, axis=0, keepdims=True) * (1.0 / 7.0)
    feat_ref[4:5, :] = jnp.sum(w_on * w2, axis=0, keepdims=True) * (1.0 / 7.0)
    feat_ref[5:6, :] = wr[2:3] * (1.0 / 7.0)

    # K=8 read; slab columns 6,7 of bc_l1 are zero
    h1 = _leaky(_dense(p_ref, "bc_l1", feat_ref[...], k=8))     # [32, TB]
    h2 = _leaky(_dense(p_ref, "bc_l2", h1))
    xmid = h1 + h2 * h1
    d1 = _leaky(_dense(p_ref, "bc_d1", xmid))
    out6 = _dense(p_ref, "bc_d2", d1)                           # [6, TB]

    # back to the world 2-D frame and bounce selection — fused [3, TB] selects
    v_bc = jnp.concatenate(
        [out6[0:1] * 3.0 * v_on + out6[1:2] * 3.0 * w_on, out6[2:3] * 3.0], axis=0)
    w_bc = jnp.concatenate(
        [out6[3:4] * 7.0 * v_on + out6[4:5] * 7.0 * w_on, out6[5:6] * 7.0], axis=0)

    cond = jnp.logical_and(bpos < z0, vz < 0.0)                 # [1, TB]
    v1 = jnp.where(cond, v_bc, v)                               # [3, TB]
    w1 = jnp.where(cond, w_bc, w)                               # [3, TB]

    # ================= AeroModel =================
    wr3 = _recode(p_ref, "ae_r", w1)                            # [3, TB]

    vn3 = jnp.sqrt(jnp.sum(v1 * v1, axis=0, keepdims=True))
    von = v1 * pl.reciprocal(vn3 + EPS, approx=True)            # [3, TB]
    proj3 = jnp.sum(wr3 * von, axis=0, keepdims=True)
    wo3 = wr3 - proj3 * von
    wn3 = jnp.sqrt(jnp.sum(wo3 * wo3, axis=0, keepdims=True))
    won = wo3 * pl.reciprocal(wn3 + EPS, approx=True)           # [3, TB]
    uon = jnp.concatenate(
        [von[1:2] * won[2:3] - von[2:3] * won[1:2],
         von[2:3] * won[0:1] - von[0:1] * won[2:3],
         von[0:1] * won[1:2] - von[1:2] * won[0:1]], axis=0)    # [3, TB]

    # feat = [ (RT@v1)[0], (RT@wr)[0], (RT@wr)[1] ] — rows 3..7 of the scratch hit
    # zero weight columns of ae_l1, so they may keep their (finite) stale values.
    feat_ref[0:1, :] = jnp.sum(von * v1, axis=0, keepdims=True)
    feat_ref[1:2, :] = jnp.sum(von * wr3, axis=0, keepdims=True)
    feat_ref[2:3, :] = jnp.sum(won * wr3, axis=0, keepdims=True)

    h = _leaky(_dense(p_ref, "ae_l1", feat_ref[...], k=8))      # [32, TB]
    h2a = _leaky(_dense(p_ref, "ae_l2", h))
    hh = h2a * h
    da = _leaky(_dense(p_ref, "ae_d1", hh))
    y = _dense(p_ref, "ae_d2", da)                              # [3, TB]

    row_b, _, _ = LAYOUT["ae_bias"]
    ae_b = p_ref[row_b:row_b + 3, BIAS_COL:BIAS_COL + 1]        # [3, 1] gravity bias
    acc = y[0:1] * von + y[1:2] * won + y[2:3] * uon + ae_b     # [3, TB]

    # packed, lane-dense output slab (rows 0-2 v_new, 3-5 w_new, 6-7 pad)
    out_ref[0:3, :] = v1 + acc * dt
    out_ref[3:6, :] = w1
    out_ref[6:8, :] = jnp.zeros((2, tb), jnp.float32)


# ---------------------------------------------------------------------------
# Parameters (PyTorch [out, in] weight layout; matches MNN._init_weights:
# N(0, 1e-6) for all Linear weights/biases; AeroModel.bias = [0, 0, -9.81]).
# ---------------------------------------------------------------------------
def make_params(key):
    shapes = [
        ("bc_rW", (3, 3)), ("bc_rb", (3,)),
        ("bc_l1W", (HIDDEN, 6)), ("bc_l1b", (HIDDEN,)),
        ("bc_l2W", (HIDDEN, HIDDEN)), ("bc_l2b", (HIDDEN,)),
        ("bc_d1W", (HIDDEN, HIDDEN)), ("bc_d1b", (HIDDEN,)),
        ("bc_d2W", (6, HIDDEN)), ("bc_d2b", (6,)),
        ("ae_rW", (3, 3)), ("ae_rb", (3,)),
        ("ae_l1W", (HIDDEN, 3)), ("ae_l1b", (HIDDEN,)),
        ("ae_l2W", (HIDDEN, HIDDEN)), ("ae_l2b", (HIDDEN,)),
        ("ae_d1W", (HIDDEN, HIDDEN)), ("ae_d1b", (HIDDEN,)),
        ("ae_d2W", (3, HIDDEN)), ("ae_d2b", (3,)),
    ]
    keys = jax.random.split(key, len(shapes))
    params = {name: jax.random.normal(k, s, jnp.float32) * 1e-6
              for (name, s), k in zip(shapes, keys)}
    params["ae_bias"] = jnp.array([0.0, 0.0, -9.81], jnp.float32)
    return params


def pack_params(params):
    """Pack all Linear weights/biases + aero bias into one [232, 128] f32 slab.
    Unwritten columns stay zero, which the kernel relies on for K=8 reads."""
    slab = jnp.zeros((SLAB_ROWS, SLAB_COLS), jnp.float32)
    for name, (row, out_d, in_d) in LAYOUT.items():
        if name == "ae_bias":
            slab = slab.at[row:row + out_d, BIAS_COL].set(params["ae_bias"])
            continue
        slab = slab.at[row:row + out_d, 0:in_d].set(params[name + "W"])
        slab = slab.at[row:row + out_d, BIAS_COL].set(params[name + "b"])
    return slab


def _round_up(x, m):
    return ((x + m - 1) // m) * m


def _pick_tb(b_pad):
    """Largest multiple-of-128 divisor of b_pad, <= MAX_TB, preferring >= 2 tiles
    (so v7x megacore gets both TensorCores when there is enough work)."""
    m = b_pad // LANE
    kmax = min(MAX_TB // LANE, max(m // 2, 1))
    best = 1
    for k in range(1, kmax + 1):
        if m % k == 0:
            best = k
    return best * LANE


def _mnn_packed_impl(z0, dt, state8, slab):
    """Core kernel launch. state8: [8, B_pad] f32 packed state (rows vx,vy,vz,
    wx,wy,wz,b,pad), B_pad a multiple of 128.  Returns [8, B_pad] (rows v_new, w_new)."""
    b_pad = state8.shape[1]
    tb = _pick_tb(b_pad)
    grid = (b_pad // tb,)
    scalars = jnp.stack([jnp.asarray(z0, jnp.float32),
                         jnp.asarray(dt, jnp.float32)])          # [2] -> SMEM

    return pl.pallas_call(
        mnn_kernel,
        grid=grid,
        in_specs=[
            pl.BlockSpec(memory_space=pltpu.MemorySpace.SMEM),       # [z0, dt]
            pl.BlockSpec((SLAB_ROWS, SLAB_COLS), lambda i: (0, 0)),  # resident params
            pl.BlockSpec((8, tb), lambda i: (0, i)),                 # packed state
        ],
        out_specs=pl.BlockSpec((8, tb), lambda i: (0, i)),
        out_shape=jax.ShapeDtypeStruct((8, b_pad), jnp.float32),
        scratch_shapes=[pltpu.VMEM((8, tb), jnp.float32)],           # feature scratch
        compiler_params=pltpu.CompilerParams(
            dimension_semantics=("parallel",)),
    )(scalars, slab, state8)


# Packed entry point: keep simulation state in [8, B_pad] layout across steps to
# avoid per-step transpose/pad HBM round-trips.
mnn_forward_packed = jax.jit(_mnn_packed_impl)


@jax.jit
def mnn_forward(z0, b, v, w, dt, slab):
    """Convenience wrapper taking PyTorch-style [B,3]/[B,1] inputs."""
    B = v.shape[0]
    b_pad = _round_up(B, LANE)

    state8 = jnp.zeros((8, b_pad), jnp.float32)
    state8 = state8.at[0:3, :B].set(v.astype(jnp.float32).T)
    state8 = state8.at[3:6, :B].set(w.astype(jnp.float32).T)
    state8 = state8.at[6, :B].set(b.astype(jnp.float32).reshape(-1))

    out8 = _mnn_packed_impl(z0, dt, state8, slab)
    return out8[0:3, :B].T, out8[3:6, :B].T


# ---------------------------------------------------------------------------
# Pure-JAX reference (mirrors the PyTorch module) for correctness checking.
# ---------------------------------------------------------------------------
def _ref_linear(x, W, b):
    return x @ W.T + b


def _ref_gs3(v, w):
    v_on = v / (jnp.linalg.norm(v, axis=-1, keepdims=True) + EPS)
    proj = jnp.sum(w * v_on, axis=-1, keepdims=True) * v_on
    w_o = w - proj
    w_on = w_o / (jnp.linalg.norm(w_o, axis=-1, keepdims=True) + EPS)
    u_on = jnp.cross(v_on, w_on)
    R = jnp.stack([v_on, w_on, u_on], axis=-1)
    RT = jnp.swapaxes(R, -1, -2)
    v_l = jnp.einsum("bij,bj->bi", RT, v)
    w_l = jnp.einsum("bij,bj->bi", RT, w)
    return R, v_l, w_l


def _ref_gs2(v2, w2):
    v_on = v2 / (jnp.linalg.norm(v2, axis=-1, keepdims=True) + EPS)
    proj = jnp.sum(w2 * v_on, axis=-1, keepdims=True) * v_on
    w_o = w2 - proj
    w_on = w_o / (jnp.linalg.norm(w_o, axis=-1, keepdims=True) + EPS)
    det = v_on[:, 0] * w_on[:, 1] - v_on[:, 1] * w_on[:, 0]
    w_on_c = jnp.where((det < 0)[:, None], -w_on, w_on)
    R2 = jnp.stack([v_on, w_on_c], axis=-1)
    RT2 = jnp.swapaxes(R2, -1, -2)
    v_l = jnp.einsum("bij,bj->bi", RT2, v2)
    w_l = jnp.einsum("bij,bj->bi", RT2, w2)
    return R2, v_l, w_l


def ref_forward(z0, b, v, w, dt, p):
    lrelu = lambda x: jnp.where(x >= 0, x, NEG_SLOPE * x)
    # BounceModel
    wr = _ref_linear(w, p["bc_rW"], p["bc_rb"])
    R2, v2l, w2l = _ref_gs2(v[:, :2], wr[:, :2])
    v_loc = jnp.concatenate([v2l, v[:, 2:3]], axis=-1)
    w_loc = jnp.concatenate([w2l, wr[:, 2:3]], axis=-1)
    xin = jnp.concatenate([v_loc / 3.0, w_loc / 7.0], axis=-1)
    h1 = lrelu(_ref_linear(xin, p["bc_l1W"], p["bc_l1b"]))
    h2 = lrelu(_ref_linear(h1, p["bc_l2W"], p["bc_l2b"]))
    x = h1 + h2 * h1
    d = lrelu(_ref_linear(x, p["bc_d1W"], p["bc_d1b"]))
    o6 = _ref_linear(d, p["bc_d2W"], p["bc_d2b"])
    v2n = jnp.einsum("bij,bj->bi", R2, o6[:, :2] * 3.0)
    w2n = jnp.einsum("bij,bj->bi", R2, o6[:, 3:5] * 7.0)
    v_bc = jnp.concatenate([v2n, o6[:, 2:3] * 3.0], axis=-1)
    w_bc = jnp.concatenate([w2n, o6[:, 5:6] * 7.0], axis=-1)
    # select
    cond = jnp.logical_and(b.reshape(-1, 1) < z0, v[:, 2:3] < 0.0)
    v1 = jnp.where(cond, v_bc, v)
    w1 = jnp.where(cond, w_bc, w)
    # AeroModel
    wr2 = _ref_linear(w1, p["ae_rW"], p["ae_rb"])
    R, vl, wl = _ref_gs3(v1, wr2)
    feat = jnp.concatenate([vl[:, :1], wl[:, :2]], axis=-1)
    h = lrelu(_ref_linear(feat, p["ae_l1W"], p["ae_l1b"]))
    h2a = lrelu(_ref_linear(h, p["ae_l2W"], p["ae_l2b"]))
    h = h2a * h
    da = lrelu(_ref_linear(h, p["ae_d1W"], p["ae_d1b"]))
    y = _ref_linear(da, p["ae_d2W"], p["ae_d2b"])
    acc = jnp.einsum("bij,bj->bi", R, y) + p["ae_bias"][None, :]
    return v1 + acc * dt, w1


if __name__ == "__main__":
    z0 = 0.1
    dt = 0.01

    key = jax.random.PRNGKey(0)
    kp, kdata = jax.random.split(key, 2)
    params = make_params(kp)
    slab = pack_params(params)          # packed once, reused across calls

    # small demo batch + a larger one to exercise the multi-tile grid path
    for B in (8, 300):
        kb, kv, kw = jax.random.split(jax.random.fold_in(kdata, B), 3)
        b = jax.random.uniform(kb, (B, 1), jnp.float32, 0.0, 0.3)   # height
        v = jax.random.normal(kv, (B, 3), jnp.float32) * 3.0        # velocity
        w = jax.random.normal(kw, (B, 3), jnp.float32) * 5.0        # spin

        v_new, w_new = mnn_forward(z0, b, v, w, dt, slab)
        jax.block_until_ready((v_new, w_new))

        v_ref, w_ref = ref_forward(z0, b, v, w, dt, params)
        np.testing.assert_allclose(np.asarray(v_new), np.asarray(v_ref),
                                   rtol=2e-4, atol=2e-5)
        np.testing.assert_allclose(np.asarray(w_new), np.asarray(w_ref),
                                   rtol=2e-4, atol=2e-5)

    print("KERNEL_OK")
</pallas_src>

<mosaic_0001>
module attributes {stable_mosaic.version = 11 : i64} {
  func.func @mnn_kernel(%arg0: i32, %arg1: memref<2xf32, #tpu.memory_space<smem>>, %arg2: memref<232x128xf32, #tpu.memory_space<vmem>>, %arg3: memref<8x128xf32, #tpu.memory_space<vmem>>, %arg4: memref<8x128xf32, #tpu.memory_space<vmem>>, %arg5: memref<8x128xf32, #tpu.memory_space<vmem>>) attributes {dimension_semantics = [#tpu.dimension_semantics<parallel>], iteration_bounds = array<i64: 1>, scalar_prefetch = 0 : i64, scratch_operands = 1 : i64, tpu.core_type = #tpu.core_type<tc>, window_params = [{transform_indices = @transform_0, window_bounds = array<i64: 2>}, {pipeline_mode = #tpu.pipeline_mode<synchronous>, transform_indices = @transform_1, window_bounds = array<i64: 232, 128>}, {transform_indices = @transform_2, window_bounds = array<i64: 8, 128>}, {transform_indices = @transform_3, window_bounds = array<i64: 8, 128>}]} {
    %c0 = arith.constant 0 : index
    %0 = memref.load %arg1[%c0] : memref<2xf32, #tpu.memory_space<smem>>
    %c1 = arith.constant 1 : index
    %1 = memref.load %arg1[%c1] : memref<2xf32, #tpu.memory_space<smem>>
    %c0_0 = arith.constant 0 : index
    %c0_1 = arith.constant 0 : index
    %2 = vector.load %arg3[%c0_0, %c0_1] : memref<8x128xf32, #tpu.memory_space<vmem>>, vector<8x128xf32>
    %3 = vector.extract_strided_slice %2 {offsets = [0, 0], sizes = [3, 128], strides = [1, 1]} : vector<8x128xf32> to vector<3x128xf32>
    %4 = vector.extract_strided_slice %2 {offsets = [3, 0], sizes = [3, 128], strides = [1, 1]} : vector<8x128xf32> to vector<3x128xf32>
    %5 = vector.extract_strided_slice %2 {offsets = [6, 0], sizes = [1, 128], strides = [1, 1]} : vector<8x128xf32> to vector<1x128xf32>
    %6 = vector.extract_strided_slice %3 {offsets = [2, 0], sizes = [1, 128], strides = [1, 1]} : vector<3x128xf32> to vector<1x128xf32>
    %cst = arith.constant 0.000000e+00 : f32
    %7 = vector.broadcast %cst : f32 to vector<2x128xf32>
    %c6 = arith.constant 6 : index
    %c0_2 = arith.constant 0 : index
    %8 = vector.load %arg5[%c6, %c0_2] : memref<8x128xf32, #tpu.memory_space<vmem>>, vector<2x128xf32>
    tpu.vector_store %arg5[%c6, %c0_2], %7 {strides = array<i32>} : memref<8x128xf32, #tpu.memory_space<vmem>>, vector<2x128xf32>,
    %c0_3 = arith.constant 0 : index
    %c32 = arith.constant 32 : index
    %9 = vector.load %arg2[%c0_3, %c32] : memref<232x128xf32, #tpu.memory_space<vmem>>, vector<3x1xf32>
    %c0_4 = arith.constant 0 : index
    %c0_5 = arith.constant 0 : index
    %10 = vector.load %arg2[%c0_4, %c0_5] : memref<232x128xf32, #tpu.memory_space<vmem>>, vector<3x1xf32>
    %11 = vector.extract_strided_slice %4 {offsets = [0, 0], sizes = [1, 128], strides = [1, 1]} : vector<3x128xf32> to vector<1x128xf32>
    %12 = vector.broadcast %10 : vector<3x1xf32> to vector<3x128xf32>
    %13 = vector.broadcast %11 : vector<1x128xf32> to vector<3x128xf32>
    %14 = arith.mulf %12, %13 : vector<3x128xf32>
    %15 = vector.broadcast %9 : vector<3x1xf32> to vector<3x128xf32>
    %16 = arith.addf %15, %14 : vector<3x128xf32>
    %c0_6 = arith.constant 0 : index
    %c1_7 = arith.constant 1 : index
    %17 = vector.load %arg2[%c0_6, %c1_7] : memref<232x128xf32, #tpu.memory_space<vmem>>, vector<3x1xf32>
    %18 = vector.extract_strided_slice %4 {offsets = [1, 0], sizes = [1, 128], strides = [1, 1]} : vector<3x128xf32> to vector<1x128xf32>
    %19 = vector.broadcast %17 : vector<3x1xf32> to vector<3x128xf32>
    %20 = vector.broadcast %18 : vector<1x128xf32> to vector<3x128xf32>
    %21 = arith.mulf %19, %20 : vector<3x128xf32>
    %22 = arith.addf %16, %21 : vector<3x128xf32>
    %c0_8 = arith.constant 0 : index
    %c2 = arith.constant 2 : index
    %23 = vector.load %arg2[%c0_8, %c2] : memref<232x128xf32, #tpu.memory_space<vmem>>, vector<3x1xf32>
    %24 = vector.extract_strided_slice %4 {offsets = [2, 0], sizes = [1, 128], strides = [1, 1]} : vector<3x128xf32> to vector<1x128xf32>
    %25 = vector.broadcast %23 : vector<3x1xf32> to vector<3x128xf32>
    %26 = vector.broadcast %24 : vector<1x128xf32> to vector<3x128xf32>
    %27 = arith.mulf %25, %26 : vector<3x128xf32>
    %28 = arith.addf %22, %27 : vector<3x128xf32>
    %29 = vector.extract_strided_slice %3 {offsets = [0, 0], sizes = [2, 128], strides = [1, 1]} : vector<3x128xf32> to vector<2x128xf32>
    %30 = vector.extract_strided_slice %28 {offsets = [0, 0], sizes = [2, 128], strides = [1, 1]} : vector<3x128xf32> to vector<2x128xf32>
    %31 = arith.mulf %29, %29 : vector<2x128xf32>
    %cst_9 = arith.constant dense<0.000000e+00> : vector<128xf32>
    %32 = vector.multi_reduction <add>, %31, %cst_9 [0] : vector<2x128xf32> to vector<128xf32>
    %33 = vector.shape_cast %32 : vector<128xf32> to vector<1x128xf32>
    %34 = math.sqrt %33 : vector<1x128xf32>
    %cst_10 = arith.constant 9.99999993E-9 : f32
    %35 = vector.broadcast %cst_10 : f32 to vector<1x128xf32>
    %36 = arith.addf %34, %35 : vector<1x128xf32>
    %37 = tpu.reciprocal %36 {approx = true} : vector<1x128xf32> -> vector<1x128xf32>
    %38 = vector.broadcast %37 : vector<1x128xf32> to vector<2x128xf32>
    %39 = arith.mulf %29, %38 : vector<2x128xf32>
    %40 = arith.mulf %30, %39 : vector<2x128xf32>
    %cst_11 = arith.constant dense<0.000000e+00> : vector<128xf32>
    %41 = vector.multi_reduction <add>, %40, %cst_11 [0] : vector<2x128xf32> to vector<128xf32>
    %42 = vector.shape_cast %41 : vector<128xf32> to vector<1x128xf32>
    %43 = vector.broadcast %42 : vector<1x128xf32> to vector<2x128xf32>
    %44 = arith.mulf %43, %39 : vector<2x128xf32>
    %45 = arith.subf %30, %44 : vector<2x128xf32>
    %46 = arith.mulf %45, %45 : vector<2x128xf32>
    %cst_12 = arith.constant dense<0.000000e+00> : vector<128xf32>
    %47 = vector.multi_reduction <add>, %46, %cst_12 [0] : vector<2x128xf32> to vector<128xf32>
    %48 = vector.shape_cast %47 : vector<128xf32> to vector<1x128xf32>
    %49 = math.sqrt %48 : vector<1x128xf32>
    %cst_13 = arith.constant 9.99999993E-9 : f32
    %50 = vector.broadcast %cst_13 : f32 to vector<1x128xf32>
    %51 = arith.addf %49, %50 : vector<1x128xf32>
    %52 = tpu.reciprocal %51 {approx = true} : vector<1x128xf32> -> vector<1x128xf32>
    %53 = vector.broadcast %52 : vector<1x128xf32> to vector<2x128xf32>
    %54 = arith.mulf %45, %53 : vector<2x128xf32>
    %55 = vector.extract_strided_slice %39 {offsets = [0, 0], sizes = [1, 128], strides = [1, 1]} : vector<2x128xf32> to vector<1x128xf32>
    %56 = vector.extract_strided_slice %54 {offsets = [1, 0], sizes = [1, 128], strides = [1, 1]} : vector<2x128xf32> to vector<1x128xf32>
    %57 = arith.mulf %55, %56 : vector<1x128xf32>
    %58 = vector.extract_strided_slice %39 {offsets = [1, 0], sizes = [1, 128], strides = [1, 1]} : vector<2x128xf32> to vector<1x128xf32>
    %59 = vector.extract_strided_slice %54 {offsets = [0, 0], sizes = [1, 128], strides = [1, 1]} : vector<2x128xf32> to vector<1x128xf32>
    %60 = arith.mulf %58, %59 : vector<1x128xf32>
    %61 = arith.subf %57, %60 : vector<1x128xf32>
    %cst_14 = arith.constant 0.000000e+00 : f32
    %62 = vector.broadcast %cst_14 : f32 to vector<1x128xf32>
    %63 = arith.cmpf olt, %61, %62 : vector<1x128xf32>
    %cst_15 = arith.constant 0.000000e+00 : f32
    %64 = vector.broadcast %cst_15 : f32 to vector<2x128xf32>
    %65 = arith.subf %64, %54 : vector<2x128xf32>
    %66 = vector.shape_cast %63 : vector<1x128xi1> to vector<1x128xi1>
    %67 = vector.broadcast %66 : vector<1x128xi1> to vector<2x128xi1>
    %68 = arith.select %67, %65, %54 : vector<2x128xi1>, vector<2x128xf32>
    %69 = arith.mulf %39, %29 : vector<2x128xf32>
    %cst_16 = arith.constant dense<0.000000e+00> : vector<128xf32>
    %70 = vector.multi_reduction <add>, %69, %cst_16 [0] : vector<2x128xf32> to vector<128xf32>
    %71 = vector.shape_cast %70 : vector<128xf32> to vector<1x128xf32>
    %cst_17 = arith.constant 0.333333343 : f32
    %72 = vector.broadcast %cst_17 : f32 to vector<1x128xf32>
    %73 = arith.mulf %71, %72 : vector<1x128xf32>
    %c0_18 = arith.constant 0 : index
    %c0_19 = arith.constant 0 : index
    %74 = vector.load %arg5[%c0_18, %c0_19] : memref<8x128xf32, #tpu.memory_space<vmem>>, vector<1x128xf32>
    tpu.vector_store %arg5[%c0_18, %c0_19], %73 {strides = array<i32>} : memref<8x128xf32, #tpu.memory_space<vmem>>, vector<1x128xf32>,
    %75 = arith.mulf %68, %29 : vector<2x128xf32>
    %cst_20 = arith.constant dense<0.000000e+00> : vector<128xf32>
    %76 = vector.multi_reduction <add>, %75, %cst_20 [0] : vector<2x128xf32> to vector<128xf32>
    %77 = vector.shape_cast %76 : vector<128xf32> to vector<1x128xf32>
    %cst_21 = arith.constant 0.333333343 : f32
    %78 = vector.broadcast %cst_21 : f32 to vector<1x128xf32>
    %79 = arith.mulf %77, %78 : vector<1x128xf32>
    %c1_22 = arith.constant 1 : index
    %c0_23 = arith.constant 0 : index
    %80 = vector.load %arg5[%c1_22, %c0_23] : memref<8x128xf32, #tpu.memory_space<vmem>>, vector<1x128xf32>
    tpu.vector_store %arg5[%c1_22, %c0_23], %79 {strides = array<i32>} : memref<8x128xf32, #tpu.memory_space<vmem>>, vector<1x128xf32>,
    %cst_24 = arith.constant 0.333333343 : f32
    %81 = vector.broadcast %cst_24 : f32 to vector<1x128xf32>
    %82 = arith.mulf %6, %81 : vector<1x128xf32>
    %c2_25 = arith.constant 2 : index
    %c0_26 = arith.constant 0 : index
    %83 = vector.load %arg5[%c2_25, %c0_26] : memref<8x128xf32, #tpu.memory_space<vmem>>, vector<1x128xf32>
    tpu.vector_store %arg5[%c2_25, %c0_26], %82 {strides = array<i32>} : memref<8x128xf32, #tpu.memory_space<vmem>>, vector<1x128xf32>,
    %84 = arith.mulf %39, %30 : vector<2x128xf32>
    %cst_27 = arith.constant dense<0.000000e+00> : vector<128xf32>
    %85 = vector.multi_reduction <add>, %84, %cst_27 [0] : vector<2x128xf32> to vector<128xf32>
    %86 = vector.shape_cast %85 : vector<128xf32> to vector<1x128xf32>
    %cst_28 = arith.constant 0.142857149 : f32
    %87 = vector.broadcast %cst_28 : f32 to vector<1x128xf32>
    %88 = arith.mulf %86, %87 : vector<1x128xf32>
    %c3 = arith.constant 3 : index
    %c0_29 = arith.constant 0 : index
    %89 = vector.load %arg5[%c3, %c0_29] : memref<8x128xf32, #tpu.memory_space<vmem>>, vector<1x128xf32>
    tpu.vector_store %arg5[%c3, %c0_29], %88 {strides = array<i32>} : memref<8x128xf32, #tpu.memory_space<vmem>>, vector<1x128xf32>,
    %90 = arith.mulf %68, %30 : vector<2x128xf32>
    %cst_30 = arith.constant dense<0.000000e+00> : vector<128xf32>
    %91 = vector.multi_reduction <add>, %90, %cst_30 [0] : vector<2x128xf32> to vector<128xf32>
    %92 = vector.shape_cast %91 : vector<128xf32> to vector<1x128xf32>
    %cst_31 = arith.constant 0.142857149 : f32
    %93 = vector.broadcast %cst_31 : f32 to vector<1x128xf32>
    %94 = arith.mulf %92, %93 : vector<1x128xf32>
    %c4 = arith.constant 4 : index
    %c0_32 = arith.constant 0 : index
    %95 = vector.load %arg5[%c4, %c0_32] : memref<8x128xf32, #tpu.memory_space<vmem>>, vector<1x128xf32>
    tpu.vector_store %arg5[%c4, %c0_32], %94 {strides = array<i32>} : memref<8x128xf32, #tpu.memory_space<vmem>>, vector<1x128xf32>,
    %96 = vector.extract_strided_slice %28 {offsets = [2, 0], sizes = [1, 128], strides = [1, 1]} : vector<3x128xf32> to vector<1x128xf32>
    %cst_33 = arith.constant 0.142857149 : f32
    %97 = vector.broadcast %cst_33 : f32 to vector<1x128xf32>
    %98 = arith.mulf %96, %97 : vector<1x128xf32>
    %c5 = arith.constant 5 : index
    %c0_34 = arith.constant 0 : index
    %99 = vector.load %arg5[%c5, %c0_34] : memref<8x128xf32, #tpu.memory_space<vmem>>, vector<1x128xf32>
    tpu.vector_store %arg5[%c5, %c0_34], %98 {strides = array<i32>} : memref<8x128xf32, #tpu.memory_space<vmem>>, vector<1x128xf32>,
    %c0_35 = arith.constant 0 : index
    %c0_36 = arith.constant 0 : index
    %100 = vector.load %arg5[%c0_35, %c0_36] : memref<8x128xf32, #tpu.memory_space<vmem>>, vector<8x128xf32>
    %c8 = arith.constant 8 : index
    %c0_37 = arith.constant 0 : index
    %101 = vector.load %arg2[%c8, %c0_37] : memref<232x128xf32, #tpu.memory_space<vmem>>, vector<32x8xf32>
    %c8_38 = arith.constant 8 : index
    %c32_39 = arith.constant 32 : index
    %102 = vector.load %arg2[%c8_38, %c32_39] : memref<232x128xf32, #tpu.memory_space<vmem>>, vector<32x1xf32>
    %103 = arith.truncf %101 : vector<32x8xf32> to vector<32x8xbf16>
    %104 = arith.truncf %100 : vector<8x128xf32> to vector<8x128xbf16>
    %cst_40 = arith.constant dense<0.000000e+00> : vector<32x128xf32>
    %105 = tpu.matmul %103, %104, %cst_40 {dimension_numbers = #tpu.dot_dimension_numbers<[1], [0], [0], [1], [0, 0, 1, 1], [], []>} : vector<32x8xbf16>, vector<8x128xbf16>, vector<32x128xf32> -> vector<32x128xf32>
    %106 = vector.broadcast %102 : vector<32x1xf32> to vector<32x128xf32>
    %107 = arith.addf %105, %106 : vector<32x128xf32>
    %cst_41 = arith.constant 0.000000e+00 : f32
    %108 = vector.broadcast %cst_41 : f32 to vector<32x128xf32>
    %109 = arith.cmpf oge, %107, %108 : vector<32x128xf32>
    %cst_42 = arith.constant 0.00999999977 : f32
    %110 = vector.broadcast %cst_42 : f32 to vector<32x128xf32>
    %111 = arith.mulf %110, %107 : vector<32x128xf32>
    %112 = arith.select %109, %107, %111 : vector<32x128xi1>, vector<32x128xf32>
    %c40 = arith.constant 40 : index
    %c0_43 = arith.constant 0 : index
    %113 = vector.load %arg2[%c40, %c0_43] : memref<232x128xf32, #tpu.memory_space<vmem>>, vector<32x32xf32>
    %c40_44 = arith.constant 40 : index
    %c32_45 = arith.constant 32 : index
    %114 = vector.load %arg2[%c40_44, %c32_45] : memref<232x128xf32, #tpu.memory_space<vmem>>, vector<32x1xf32>
    %115 = arith.truncf %113 : vector<32x32xf32> to vector<32x32xbf16>
    %116 = arith.truncf %112 : vector<32x128xf32> to vector<32x128xbf16>
    %cst_46 = arith.constant dense<0.000000e+00> : vector<32x128xf32>
    %117 = tpu.matmul %115, %116, %cst_46 {dimension_numbers = #tpu.dot_dimension_numbers<[1], [0], [0], [1], [0, 0, 1, 1], [], []>} : vector<32x32xbf16>, vector<32x128xbf16>, vector<32x128xf32> -> vector<32x128xf32>
    %118 = vector.broadcast %114 : vector<32x1xf32> to vector<32x128xf32>
    %119 = arith.addf %117, %118 : vector<32x128xf32>
    %cst_47 = arith.constant 0.000000e+00 : f32
    %120 = vector.broadcast %cst_47 : f32 to vector<32x128xf32>
    %121 = arith.cmpf oge, %119, %120 : vector<32x128xf32>
    %cst_48 = arith.constant 0.00999999977 : f32
    %122 = vector.broadcast %cst_48 : f32 to vector<32x128xf32>
    %123 = arith.mulf %122, %119 : vector<32x128xf32>
    %124 = arith.select %121, %119, %123 : vector<32x128xi1>, vector<32x128xf32>
    %125 = arith.mulf %124, %112 : vector<32x128xf32>
    %126 = arith.addf %112, %125 : vector<32x128xf32>
    %c72 = arith.constant 72 : index
    %c0_49 = arith.constant 0 : index
    %127 = vector.load %arg2[%c72, %c0_49] : memref<232x128xf32, #tpu.memory_space<vmem>>, vector<32x32xf32>
    %c72_50 = arith.constant 72 : index
    %c32_51 = arith.constant 32 : index
    %128 = vector.load %arg2[%c72_50, %c32_51] : memref<232x128xf32, #tpu.memory_space<vmem>>, vector<32x1xf32>
    %129 = arith.truncf %127 : vector<32x32xf32> to vector<32x32xbf16>
    %130 = arith.truncf %126 : vector<32x128xf32> to vector<32x128xbf16>
    %cst_52 = arith.constant dense<0.000000e+00> : vector<32x128xf32>
    %131 = tpu.matmul %129, %130, %cst_52 {dimension_numbers = #tpu.dot_dimension_numbers<[1], [0], [0], [1], [0, 0, 1, 1], [], []>} : vector<32x32xbf16>, vector<32x128xbf16>, vector<32x128xf32> -> vector<32x128xf32>
    %132 = vector.broadcast %128 : vector<32x1xf32> to vector<32x128xf32>
    %133 = arith.addf %131, %132 : vector<32x128xf32>
    %cst_53 = arith.constant 0.000000e+00 : f32
    %134 = vector.broadcast %cst_53 : f32 to vector<32x128xf32>
    %135 = arith.cmpf oge, %133, %134 : vector<32x128xf32>
    %cst_54 = arith.constant 0.00999999977 : f32
    %136 = vector.broadcast %cst_54 : f32 to vector<32x128xf32>
    %137 = arith.mulf %136, %133 : vector<32x128xf32>
    %138 = arith.select %135, %133, %137 : vector<32x128xi1>, vector<32x128xf32>
    %c104 = arith.constant 104 : index
    %c0_55 = arith.constant 0 : index
    %139 = vector.load %arg2[%c104, %c0_55] : memref<232x128xf32, #tpu.memory_space<vmem>>, vector<6x32xf32>
    %c104_56 = arith.constant 104 : index
    %c32_57 = arith.constant 32 : index
    %140 = vector.load %arg2[%c104_56, %c32_57] : memref<232x128xf32, #tpu.memory_space<vmem>>, vector<6x1xf32>
    %141 = arith.truncf %139 : vector<6x32xf32> to vector<6x32xbf16>
    %142 = arith.truncf %138 : vector<32x128xf32> to vector<32x128xbf16>
    %cst_58 = arith.constant dense<0.000000e+00> : vector<6x128xf32>
    %143 = tpu.matmul %141, %142, %cst_58 {dimension_numbers = #tpu.dot_dimension_numbers<[1], [0], [0], [1], [0, 0, 1, 1], [], []>} : vector<6x32xbf16>, vector<32x128xbf16>, vector<6x128xf32> -> vector<6x128xf32>
    %144 = vector.broadcast %140 : vector<6x1xf32> to vector<6x128xf32>
    %145 = arith.addf %143, %144 : vector<6x128xf32>
    %146 = vector.extract_strided_slice %145 {offsets = [0, 0], sizes = [1, 128], strides = [1, 1]} : vector<6x128xf32> to vector<1x128xf32>
    %cst_59 = arith.constant 3.000000e+00 : f32
    %147 = vector.broadcast %cst_59 : f32 to vector<1x128xf32>
    %148 = arith.mulf %146, %147 : vector<1x128xf32>
    %149 = vector.broadcast %148 : vector<1x128xf32> to vector<2x128xf32>
    %150 = arith.mulf %149, %39 : vector<2x128xf32>
    %151 = vector.extract_strided_slice %145 {offsets = [1, 0], sizes = [1, 128], strides = [1, 1]} : vector<6x128xf32> to vector<1x128xf32>
    %cst_60 = arith.constant 3.000000e+00 : f32
    %152 = vector.broadcast %cst_60 : f32 to vector<1x128xf32>
    %153 = arith.mulf %151, %152 : vector<1x128xf32>
    %154 = vector.broadcast %153 : vector<1x128xf32> to vector<2x128xf32>
    %155 = arith.mulf %154, %68 : vector<2x128xf32>
    %156 = arith.addf %150, %155 : vector<2x128xf32>
    %157 = vector.extract_strided_slice %145 {offsets = [2, 0], sizes = [1, 128], strides = [1, 1]} : vector<6x128xf32> to vector<1x128xf32>
    %cst_61 = arith.constant 3.000000e+00 : f32
    %158 = vector.broadcast %cst_61 : f32 to vector<1x128xf32>
    %159 = arith.mulf %157, %158 : vector<1x128xf32>
    %160 = tpu.concatenate %156, %159 in 0 : vector<2x128xf32>, vector<1x128xf32> -> vector<3x128xf32>
    %161 = vector.extract_strided_slice %145 {offsets = [3, 0], sizes = [1, 128], strides = [1, 1]} : vector<6x128xf32> to vector<1x128xf32>
    %cst_62 = arith.constant 7.000000e+00 : f32
    %162 = vector.broadcast %cst_62 : f32 to vector<1x128xf32>
    %163 = arith.mulf %161, %162 : vector<1x128xf32>
    %164 = vector.broadcast %163 : vector<1x128xf32> to vector<2x128xf32>
    %165 = arith.mulf %164, %39 : vector<2x128xf32>
    %166 = vector.extract_strided_slice %145 {offsets = [4, 0], sizes = [1, 128], strides = [1, 1]} : vector<6x128xf32> to vector<1x128xf32>
    %cst_63 = arith.constant 7.000000e+00 : f32
    %167 = vector.broadcast %cst_63 : f32 to vector<1x128xf32>
    %168 = arith.mulf %166, %167 : vector<1x128xf32>
    %169 = vector.broadcast %168 : vector<1x128xf32> to vector<2x128xf32>
    %170 = arith.mulf %169, %68 : vector<2x128xf32>
    %171 = arith.addf %165, %170 : vector<2x128xf32>
    %172 = vector.extract_strided_slice %145 {offsets = [5, 0], sizes = [1, 128], strides = [1, 1]} : vector<6x128xf32> to vector<1x128xf32>
    %cst_64 = arith.constant 7.000000e+00 : f32
    %173 = vector.broadcast %cst_64 : f32 to vector<1x128xf32>
    %174 = arith.mulf %172, %173 : vector<1x128xf32>
    %175 = tpu.concatenate %171, %174 in 0 : vector<2x128xf32>, vector<1x128xf32> -> vector<3x128xf32>
    %176 = vector.broadcast %0 : f32 to vector<1x128xf32>
    %177 = arith.cmpf olt, %5, %176 : vector<1x128xf32>
    %cst_65 = arith.constant 0.000000e+00 : f32
    %178 = vector.broadcast %cst_65 : f32 to vector<1x128xf32>
    %179 = arith.cmpf olt, %6, %178 : vector<1x128xf32>
    %180 = arith.andi %177, %179 : vector<1x128xi1>
    %181 = vector.shape_cast %180 : vector<1x128xi1> to vector<1x128xi1>
    %182 = vector.broadcast %181 : vector<1x128xi1> to vector<3x128xi1>
    %183 = arith.select %182, %160, %3 : vector<3x128xi1>, vector<3x128xf32>
    %184 = vector.shape_cast %180 : vector<1x128xi1> to vector<1x128xi1>
    %185 = vector.broadcast %184 : vector<1x128xi1> to vector<3x128xi1>
    %186 = arith.select %185, %175, %4 : vector<3x128xi1>, vector<3x128xf32>
    %c112 = arith.constant 112 : index
    %c32_66 = arith.constant 32 : index
    %187 = vector.load %arg2[%c112, %c32_66] : memref<232x128xf32, #tpu.memory_space<vmem>>, vector<3x1xf32>
    %c112_67 = arith.constant 112 : index
    %c0_68 = arith.constant 0 : index
    %188 = vector.load %arg2[%c112_67, %c0_68] : memref<232x128xf32, #tpu.memory_space<vmem>>, vector<3x1xf32>
    %189 = vector.extract_strided_slice %186 {offsets = [0, 0], sizes = [1, 128], strides = [1, 1]} : vector<3x128xf32> to vector<1x128xf32>
    %190 = vector.broadcast %188 : vector<3x1xf32> to vector<3x128xf32>
    %191 = vector.broadcast %189 : vector<1x128xf32> to vector<3x128xf32>
    %192 = arith.mulf %190, %191 : vector<3x128xf32>
    %193 = vector.broadcast %187 : vector<3x1xf32> to vector<3x128xf32>
    %194 = arith.addf %193, %192 : vector<3x128xf32>
    %c112_69 = arith.constant 112 : index
    %c1_70 = arith.constant 1 : index
    %195 = vector.load %arg2[%c112_69, %c1_70] : memref<232x128xf32, #tpu.memory_space<vmem>>, vector<3x1xf32>
    %196 = vector.extract_strided_slice %186 {offsets = [1, 0], sizes = [1, 128], strides = [1, 1]} : vector<3x128xf32> to vector<1x128xf32>
    %197 = vector.broadcast %195 : vector<3x1xf32> to vector<3x128xf32>
    %198 = vector.broadcast %196 : vector<1x128xf32> to vector<3x128xf32>
    %199 = arith.mulf %197, %198 : vector<3x128xf32>
    %200 = arith.addf %194, %199 : vector<3x128xf32>
    %c112_71 = arith.constant 112 : index
    %c2_72 = arith.constant 2 : index
    %201 = vector.load %arg2[%c112_71, %c2_72] : memref<232x128xf32, #tpu.memory_space<vmem>>, vector<3x1xf32>
    %202 = vector.extract_strided_slice %186 {offsets = [2, 0], sizes = [1, 128], strides = [1, 1]} : vector<3x128xf32> to vector<1x128xf32>
    %203 = vector.broadcast %201 : vector<3x1xf32> to vector<3x128xf32>
    %204 = vector.broadcast %202 : vector<1x128xf32> to vector<3x128xf32>
    %205 = arith.mulf %203, %204 : vector<3x128xf32>
    %206 = arith.addf %200, %205 : vector<3x128xf32>
    %207 = arith.mulf %183, %183 : vector<3x128xf32>
    %cst_73 = arith.constant dense<0.000000e+00> : vector<128xf32>
    %208 = vector.multi_reduction <add>, %207, %cst_73 [0] : vector<3x128xf32> to vector<128xf32>
    %209 = vector.shape_cast %208 : vector<128xf32> to vector<1x128xf32>
    %210 = math.sqrt %209 : vector<1x128xf32>
    %cst_74 = arith.constant 9.99999993E-9 : f32
    %211 = vector.broadcast %cst_74 : f32 to vector<1x128xf32>
    %212 = arith.addf %210, %211 : vector<1x128xf32>
    %213 = tpu.reciprocal %212 {approx = true} : vector<1x128xf32> -> vector<1x128xf32>
    %214 = vector.broadcast %213 : vector<1x128xf32> to vector<3x128xf32>
    %215 = arith.mulf %183, %214 : vector<3x128xf32>
    %216 = arith.mulf %206, %215 : vector<3x128xf32>
    %cst_75 = arith.constant dense<0.000000e+00> : vector<128xf32>
    %217 = vector.multi_reduction <add>, %216, %cst_75 [0] : vector<3x128xf32> to vector<128xf32>
    %218 = vector.shape_cast %217 : vector<128xf32> to vector<1x128xf32>
    %219 = vector.broadcast %218 : vector<1x128xf32> to vector<3x128xf32>
    %220 = arith.mulf %219, %215 : vector<3x128xf32>
    %221 = arith.subf %206, %220 : vector<3x128xf32>
    %222 = arith.mulf %221, %221 : vector<3x128xf32>
    %cst_76 = arith.constant dense<0.000000e+00> : vector<128xf32>
    %223 = vector.multi_reduction <add>, %222, %cst_76 [0] : vector<3x128xf32> to vector<128xf32>
    %224 = vector.shape_cast %223 : vector<128xf32> to vector<1x128xf32>
    %225 = math.sqrt %224 : vector<1x128xf32>
    %cst_77 = arith.constant 9.99999993E-9 : f32
    %226 = vector.broadcast %cst_77 : f32 to vector<1x128xf32>
    %227 = arith.addf %225, %226 : vector<1x128xf32>
    %228 = tpu.reciprocal %227 {approx = true} : vector<1x128xf32> -> vector<1x128xf32>
    %229 = vector.broadcast %228 : vector<1x128xf32> to vector<3x128xf32>
    %230 = arith.mulf %221, %229 : vector<3x128xf32>
    %231 = vector.extract_strided_slice %215 {offsets = [1, 0], sizes = [1, 128], strides = [1, 1]} : vector<3x128xf32> to vector<1x128xf32>
    %232 = vector.extract_strided_slice %230 {offsets = [2, 0], sizes = [1, 128], strides = [1, 1]} : vector<3x128xf32> to vector<1x128xf32>
    %233 = arith.mulf %231, %232 : vector<1x128xf32>
    %234 = vector.extract_strided_slice %215 {offsets = [2, 0], sizes = [1, 128], strides = [1, 1]} : vector<3x128xf32> to vector<1x128xf32>
    %235 = vector.extract_strided_slice %230 {offsets = [1, 0], sizes = [1, 128], strides = [1, 1]} : vector<3x128xf32> to vector<1x128xf32>
    %236 = arith.mulf %234, %235 : vector<1x128xf32>
    %237 = arith.subf %233, %236 : vector<1x128xf32>
    %238 = vector.extract_strided_slice %215 {offsets = [2, 0], sizes = [1, 128], strides = [1, 1]} : vector<3x128xf32> to vector<1x128xf32>
    %239 = vector.extract_strided_slice %230 {offsets = [0, 0], sizes = [1, 128], strides = [1, 1]} : vector<3x128xf32> to vector<1x128xf32>
    %240 = arith.mulf %238, %239 : vector<1x128xf32>
    %241 = vector.extract_strided_slice %215 {offsets = [0, 0], sizes = [1, 128], strides = [1, 1]} : vector<3x128xf32> to vector<1x128xf32>
    %242 = vector.extract_strided_slice %230 {offsets = [2, 0], sizes = [1, 128], strides = [1, 1]} : vector<3x128xf32> to vector<1x128xf32>
    %243 = arith.mulf %241, %242 : vector<1x128xf32>
    %244 = arith.subf %240, %243 : vector<1x128xf32>
    %245 = vector.extract_strided_slice %215 {offsets = [0, 0], sizes = [1, 128], strides = [1, 1]} : vector<3x128xf32> to vector<1x128xf32>
    %246 = vector.extract_strided_slice %230 {offsets = [1, 0], sizes = [1, 128], strides = [1, 1]} : vector<3x128xf32> to vector<1x128xf32>
    %247 = arith.mulf %245, %246 : vector<1x128xf32>
    %248 = vector.extract_strided_slice %215 {offsets = [1, 0], sizes = [1, 128], strides = [1, 1]} : vector<3x128xf32> to vector<1x128xf32>
    %249 = vector.extract_strided_slice %230 {offsets = [0, 0], sizes = [1, 128], strides = [1, 1]} : vector<3x128xf32> to vector<1x128xf32>
    %250 = arith.mulf %248, %249 : vector<1x128xf32>
    %251 = arith.subf %247, %250 : vector<1x128xf32>
    %252 = tpu.concatenate %237, %244, %251 in 0 : vector<1x128xf32>, vector<1x128xf32>, vector<1x128xf32> -> vector<3x128xf32>
    %253 = arith.mulf %215, %183 : vector<3x128xf32>
    %cst_78 = arith.constant dense<0.000000e+00> : vector<128xf32>
    %254 = vector.multi_reduction <add>, %253, %cst_78 [0] : vector<3x128xf32> to vector<128xf32>
    %255 = vector.shape_cast %254 : vector<128xf32> to vector<1x128xf32>
    %c0_79 = arith.constant 0 : index
    %c0_80 = arith.constant 0 : index
    %256 = vector.load %arg5[%c0_79, %c0_80] : memref<8x128xf32, #tpu.memory_space<vmem>>, vector<1x128xf32>
    tpu.vector_store %arg5[%c0_79, %c0_80], %255 {strides = array<i32>} : memref<8x128xf32, #tpu.memory_space<vmem>>, vector<1x128xf32>,
    %257 = arith.mulf %215, %206 : vector<3x128xf32>
    %cst_81 = arith.constant dense<0.000000e+00> : vector<128xf32>
    %258 = vector.multi_reduction <add>, %257, %cst_81 [0] : vector<3x128xf32> to vector<128xf32>
    %259 = vector.shape_cast %258 : vector<128xf32> to vector<1x128xf32>
    %c1_82 = arith.constant 1 : index
    %c0_83 = arith.constant 0 : index
    %260 = vector.load %arg5[%c1_82, %c0_83] : memref<8x128xf32, #tpu.memory_space<vmem>>, vector<1x128xf32>
    tpu.vector_store %arg5[%c1_82, %c0_83], %259 {strides = array<i32>} : memref<8x128xf32, #tpu.memory_space<vmem>>, vector<1x128xf32>,
    %261 = arith.mulf %230, %206 : vector<3x128xf32>
    %cst_84 = arith.constant dense<0.000000e+00> : vector<128xf32>
    %262 = vector.multi_reduction <add>, %261, %cst_84 [0] : vector<3x128xf32> to vector<128xf32>
    %263 = vector.shape_cast %262 : vector<128xf32> to vector<1x128xf32>
    %c2_85 = arith.constant 2 : index
    %c0_86 = arith.constant 0 : index
    %264 = vector.load %arg5[%c2_85, %c0_86] : memref<8x128xf32, #tpu.memory_space<vmem>>, vector<1x128xf32>
    tpu.vector_store %arg5[%c2_85, %c0_86], %263 {strides = array<i32>} : memref<8x128xf32, #tpu.memory_space<vmem>>, vector<1x128xf32>,
    %c0_87 = arith.constant 0 : index
    %c0_88 = arith.constant 0 : index
    %265 = vector.load %arg5[%c0_87, %c0_88] : memref<8x128xf32, #tpu.memory_space<vmem>>, vector<8x128xf32>
    %c120 = arith.constant 120 : index
    %c0_89 = arith.constant 0 : index
    %266 = vector.load %arg2[%c120, %c0_89] : memref<232x128xf32, #tpu.memory_space<vmem>>, vector<32x8xf32>
    %c120_90 = arith.constant 120 : index
    %c32_91 = arith.constant 32 : index
    %267 = vector.load %arg2[%c120_90, %c32_91] : memref<232x128xf32, #tpu.memory_space<vmem>>, vector<32x1xf32>
    %268 = arith.truncf %266 : vector<32x8xf32> to vector<32x8xbf16>
    %269 = arith.truncf %265 : vector<8x128xf32> to vector<8x128xbf16>
    %cst_92 = arith.constant dense<0.000000e+00> : vector<32x128xf32>
    %270 = tpu.matmul %268, %269, %cst_92 {dimension_numbers = #tpu.dot_dimension_numbers<[1], [0], [0], [1], [0, 0, 1, 1], [], []>} : vector<32x8xbf16>, vector<8x128xbf16>, vector<32x128xf32> -> vector<32x128xf32>
    %271 = vector.broadcast %267 : vector<32x1xf32> to vector<32x128xf32>
    %272 = arith.addf %270, %271 : vector<32x128xf32>
    %cst_93 = arith.constant 0.000000e+00 : f32
    %273 = vector.broadcast %cst_93 : f32 to vector<32x128xf32>
    %274 = arith.cmpf oge, %272, %273 : vector<32x128xf32>
    %cst_94 = arith.constant 0.00999999977 : f32
    %275 = vector.broadcast %cst_94 : f32 to vector<32x128xf32>
    %276 = arith.mulf %275, %272 : vector<32x128xf32>
    %277 = arith.select %274, %272, %276 : vector<32x128xi1>, vector<32x128xf32>
    %c152 = arith.constant 152 : index
    %c0_95 = arith.constant 0 : index
    %278 = vector.load %arg2[%c152, %c0_95] : memref<232x128xf32, #tpu.memory_space<vmem>>, vector<32x32xf32>
    %c152_96 = arith.constant 152 : index
    %c32_97 = arith.constant 32 : index
    %279 = vector.load %arg2[%c152_96, %c32_97] : memref<232x128xf32, #tpu.memory_space<vmem>>, vector<32x1xf32>
    %280 = arith.truncf %278 : vector<32x32xf32> to vector<32x32xbf16>
    %281 = arith.truncf %277 : vector<32x128xf32> to vector<32x128xbf16>
    %cst_98 = arith.constant dense<0.000000e+00> : vector<32x128xf32>
    %282 = tpu.matmul %280, %281, %cst_98 {dimension_numbers = #tpu.dot_dimension_numbers<[1], [0], [0], [1], [0, 0, 1, 1], [], []>} : vector<32x32xbf16>, vector<32x128xbf16>, vector<32x128xf32> -> vector<32x128xf32>
    %283 = vector.broadcast %279 : vector<32x1xf32> to vector<32x128xf32>
    %284 = arith.addf %282, %283 : vector<32x128xf32>
    %cst_99 = arith.constant 0.000000e+00 : f32
    %285 = vector.broadcast %cst_99 : f32 to vector<32x128xf32>
    %286 = arith.cmpf oge, %284, %285 : vector<32x128xf32>
    %cst_100 = arith.constant 0.00999999977 : f32
    %287 = vector.broadcast %cst_100 : f32 to vector<32x128xf32>
    %288 = arith.mulf %287, %284 : vector<32x128xf32>
    %289 = arith.select %286, %284, %288 : vector<32x128xi1>, vector<32x128xf32>
    %290 = arith.mulf %289, %277 : vector<32x128xf32>
    %c184 = arith.constant 184 : index
    %c0_101 = arith.constant 0 : index
    %291 = vector.load %arg2[%c184, %c0_101] : memref<232x128xf32, #tpu.memory_space<vmem>>, vector<32x32xf32>
    %c184_102 = arith.constant 184 : index
    %c32_103 = arith.constant 32 : index
    %292 = vector.load %arg2[%c184_102, %c32_103] : memref<232x128xf32, #tpu.memory_space<vmem>>, vector<32x1xf32>
    %293 = arith.truncf %291 : vector<32x32xf32> to vector<32x32xbf16>
    %294 = arith.truncf %290 : vector<32x128xf32> to vector<32x128xbf16>
    %cst_104 = arith.constant dense<0.000000e+00> : vector<32x128xf32>
    %295 = tpu.matmul %293, %294, %cst_104 {dimension_numbers = #tpu.dot_dimension_numbers<[1], [0], [0], [1], [0, 0, 1, 1], [], []>} : vector<32x32xbf16>, vector<32x128xbf16>, vector<32x128xf32> -> vector<32x128xf32>
    %296 = vector.broadcast %292 : vector<32x1xf32> to vector<32x128xf32>
    %297 = arith.addf %295, %296 : vector<32x128xf32>
    %cst_105 = arith.constant 0.000000e+00 : f32
    %298 = vector.broadcast %cst_105 : f32 to vector<32x128xf32>
    %299 = arith.cmpf oge, %297, %298 : vector<32x128xf32>
    %cst_106 = arith.constant 0.00999999977 : f32
    %300 = vector.broadcast %cst_106 : f32 to vector<32x128xf32>
    %301 = arith.mulf %300, %297 : vector<32x128xf32>
    %302 = arith.select %299, %297, %301 : vector<32x128xi1>, vector<32x128xf32>
    %c216 = arith.constant 216 : index
    %c0_107 = arith.constant 0 : index
    %303 = vector.load %arg2[%c216, %c0_107] : memref<232x128xf32, #tpu.memory_space<vmem>>, vector<3x32xf32>
    %c216_108 = arith.constant 216 : index
    %c32_109 = arith.constant 32 : index
    %304 = vector.load %arg2[%c216_108, %c32_109] : memref<232x128xf32, #tpu.memory_space<vmem>>, vector<3x1xf32>
    %305 = arith.truncf %303 : vector<3x32xf32> to vector<3x32xbf16>
    %306 = arith.truncf %302 : vector<32x128xf32> to vector<32x128xbf16>
    %cst_110 = arith.constant dense<0.000000e+00> : vector<3x128xf32>
    %307 = tpu.matmul %305, %306, %cst_110 {dimension_numbers = #tpu.dot_dimension_numbers<[1], [0], [0], [1], [0, 0, 1, 1], [], []>} : vector<3x32xbf16>, vector<32x128xbf16>, vector<3x128xf32> -> vector<3x128xf32>
    %308 = vector.broadcast %304 : vector<3x1xf32> to vector<3x128xf32>
    %309 = arith.addf %307, %308 : vector<3x128xf32>
    %c224 = arith.constant 224 : index
    %c32_111 = arith.constant 32 : index
    %310 = vector.load %arg2[%c224, %c32_111] : memref<232x128xf32, #tpu.memory_space<vmem>>, vector<3x1xf32>
    %311 = vector.extract_strided_slice %309 {offsets = [0, 0], sizes = [1, 128], strides = [1, 1]} : vector<3x128xf32> to vector<1x128xf32>
    %312 = vector.broadcast %311 : vector<1x128xf32> to vector<3x128xf32>
    %313 = arith.mulf %312, %215 : vector<3x128xf32>
    %314 = vector.extract_strided_slice %309 {offsets = [1, 0], sizes = [1, 128], strides = [1, 1]} : vector<3x128xf32> to vector<1x128xf32>
    %315 = vector.broadcast %314 : vector<1x128xf32> to vector<3x128xf32>
    %316 = arith.mulf %315, %230 : vector<3x128xf32>
    %317 = arith.addf %313, %316 : vector<3x128xf32>
    %318 = vector.extract_strided_slice %309 {offsets = [2, 0], sizes = [1, 128], strides = [1, 1]} : vector<3x128xf32> to vector<1x128xf32>
    %319 = vector.broadcast %318 : vector<1x128xf32> to vector<3x128xf32>
    %320 = arith.mulf %319, %252 : vector<3x128xf32>
    %321 = arith.addf %317, %320 : vector<3x128xf32>
    %322 = vector.broadcast %310 : vector<3x1xf32> to vector<3x128xf32>
    %323 = arith.addf %321, %322 : vector<3x128xf32>
    %324 = vector.broadcast %1 : f32 to vector<3x128xf32>
    %325 = arith.mulf %323, %324 : vector<3x128xf32>
    %326 = arith.addf %183, %325 : vector<3x128xf32>
    %c0_112 = arith.constant 0 : index
    %c0_113 = arith.constant 0 : index
    %327 = vector.load %arg4[%c0_112, %c0_113] : memref<8x128xf32, #tpu.memory_space<vmem>>, vector<3x128xf32>
    tpu.vector_store %arg4[%c0_112, %c0_113], %326 {strides = array<i32>} : memref<8x128xf32, #tpu.memory_space<vmem>>, vector<3x128xf32>,
    %c3_114 = arith.constant 3 : index
    %c0_115 = arith.constant 0 : index
    %328 = vector.load %arg4[%c3_114, %c0_115] : memref<8x128xf32, #tpu.memory_space<vmem>>, vector<3x128xf32>
    tpu.vector_store %arg4[%c3_114, %c0_115], %186 {strides = array<i32>} : memref<8x128xf32, #tpu.memory_space<vmem>>, vector<3x128xf32>,
    %cst_116 = arith.constant 0.000000e+00 : f32
    %329 = vector.broadcast %cst_116 : f32 to vector<2x128xf32>
    %c6_117 = arith.constant 6 : index
    %c0_118 = arith.constant 0 : index
    %330 = vector.load %arg4[%c6_117, %c0_118] : memref<8x128xf32, #tpu.memory_space<vmem>>, vector<2x128xf32>
    tpu.vector_store %arg4[%c6_117, %c0_118], %329 {strides = array<i32>} : memref<8x128xf32, #tpu.memory_space<vmem>>, vector<2x128xf32>,
    return
  }
  func.func @transform_0(%arg0: i32) -> i32 {
    %c0_i32 = arith.constant 0 : i32
    %c0_i32_0 = arith.constant 0 : i32
    return %c0_i32 : i32
  }
  func.func @transform_1(%arg0: i32) -> (i32, i32) {
    %c0_i32 = arith.constant 0 : i32
    %c0_i32_0 = arith.constant 0 : i32
    %c0_i32_1 = arith.constant 0 : i32
    return %c0_i32, %c0_i32_0 : i32, i32
  }
  func.func @transform_2(%arg0: i32) -> (i32, i32) {
    %c0_i32 = arith.constant 0 : i32
    %c0_i32_0 = arith.constant 0 : i32
    return %c0_i32, %arg0 : i32, i32
  }
  func.func @transform_3(%arg0: i32) -> (i32, i32) {
    %c0_i32 = arith.constant 0 : i32
    %c0_i32_0 = arith.constant 0 : i32
    return %c0_i32, %arg0 : i32, i32
  }
}

</mosaic_0001>

<llo_original>
// kernel: mnn_forward.1
$region0: #{mnn_forward.1}
  #allocation0 [shape = 'u32[]', space=smem, size = 0x4, offset = 0x4, fixed_abs, tag = 'smem constant byte address 0x4 - core index']
  #allocation1 [shape = 'u32[144,128]{1,0:T(1,128)}', space=vmem, size = 0x12000, scoped, tag = 'internal scratch']
  #allocation2 [shape = 'f32[8,128]{1,0:T(8,128)}', space=vmem, size = 0x1000, scoped, tag = 'scratch operand']
  %s0 = inlined_call_operand.vmem [shape: f32[2], index: 0, kind: input, shape index: {}]
  %s1 = inlined_call_operand.hbm [shape: f32[232,128], index: 1, kind: input, shape index: {}]
  %s2 = inlined_call_operand.vmem [shape: f32[8,128], index: 2, kind: input, shape index: {}]
  %s3 = inlined_call_operand.vmem [shape: f32[8,128], index: 3, kind: output, shape index: {}]
  %s4 = sld [smem:[#allocation0]]
  $region30: #{mnn_forward.1} parent=0
    _
  %s6 = ssub.s32 1, %s4
  %s7 = scalar_select 0, %s6, %s4
  $region1: #{mnn_forward.1} parent=0
    #allocation3 [shape = 'u8[512]{0}', space=smem, size = 0x200, scoped, tag = 'input window, operand 0, single buffered']
    #allocation4 [shape = 's32[1]{0}', space=sflag, size = 0x4, scoped, tag = 'scoped memory for mnn_forward.1']
    #allocation5 [shape = 's32[1]{0}', space=sflag, size = 0x4, scoped, tag = 'scoped memory for mnn_forward.1']
    #allocation6 [shape = 'u8[118784]{0}', space=vmem, size = 0x1d000, scoped, tag = 'input window, operand 1, single buffered']
    %8 = vsyncpa [#allocation5], 0
    %9 = vsyncpa [#allocation4], 0
    // Predicated region
    $region2: #{mnn_forward.1} parent=1 // pred_check
      _
    $region3: #{mnn_forward.1} parent=1 // pred_check_branch
      %11 = sbr.rel (0) target = $region5
    $region4: #{mnn_forward.1} parent=1 // pred_region
      %s13 = ssub.s32 16, 16
      %14 = vsyncadd [#allocation5], %s13
      %s16 = sshll.u32 %s0, 4
      %s17 = int_to_ptr.vmem [resolvable:$true] %s16
      %19 = dma.vmem_to_smem %s17, 16, [#allocation3], [#allocation5]
    $region5: #{mnn_forward.1} parent=1 // pred_fallthru
      _
    // Predicated region
    $region6: #{mnn_forward.1} parent=1 // pred_check
      _
    $region7: #{mnn_forward.1} parent=1 // pred_check_branch
      %21 = sbr.rel (0) target = $region9
    $region8: #{mnn_forward.1} parent=1 // pred_region
      %s23 = ssub.s32 3712, 3712
      %24 = vsyncadd [#allocation4], %s23
      %s25 = sshll.u32 [#allocation6], 4
      %s26 = int_to_ptr.vmem [resolvable:$true] %s25
      %31 = dma.hbm_to_vmem [thread:$0]  %s1, 3712, %s26, [#allocation4], 128, 128, 8
    $region9: #{mnn_forward.1} parent=1 // pred_fallthru
      _
    // Predicated region
    $region10: #{mnn_forward.1} parent=1 // pred_check
      _
    $region11: #{mnn_forward.1} parent=1 // pred_check_branch
      %33 = sbr.rel (0) target = $region13
    $region12: #{mnn_forward.1} parent=1 // pred_region
      _
    $region13: #{mnn_forward.1} parent=1 // pred_fallthru
      _
    // Predicated region
    $region14: #{mnn_forward.1} parent=1 // pred_check
      _
    $region15: #{mnn_forward.1} parent=1 // pred_check_branch
      %35 = sbr.rel (0) target = $region17
    $region16: #{mnn_forward.1} parent=1 // pred_region
      %36 = dma.done [#allocation5], 16
    $region17: #{mnn_forward.1} parent=1 // pred_fallthru
      _
    // Predicated region
    $region18: #{mnn_forward.1} parent=1 // pred_check
      _
    $region19: #{mnn_forward.1} parent=1 // pred_check_branch
      %38 = sbr.rel (0) target = $region21
    $region20: #{mnn_forward.1} parent=1 // pred_region
      %39 = dma.done [#allocation4], 3712
    $region21: #{mnn_forward.1} parent=1 // pred_fallthru
      _
    %40 = sfence
    %s42 = sld [smem:[#allocation3]]
    %s43 = sld [smem:[#allocation3 + $0x1]]
    %v44 = vld [vmem:[%s2] sm:$0xff]
    %45 = vst [vmem:[#allocation2 + $0x6] sm:$0x3] 0.0
    %v46 = vld [vmem:[#allocation6] sm:$0x7]
    %48 = vset.pattern.permute.xlu0 0
    %49 = vperm.xlu0 %48, %v46
    %v50 = vpop.permute.xlu0 %49
    %v52 = vlaneseq
    %v53 = vshrl.u32 %v52, 7
    %v54 = vsub.s32 3, %v53
    %v55 = vrot.slane %v44, %v54
    %v56 = vmul.f32 %v50, %v55
    %57 = vset.pattern.permute.xlu0 32
    %58 = vperm.xlu0 %57, %v46
    %v59 = vpop.permute.xlu0 %58
    %v61 = vadd.f32 %v59, %v56
    %62 = vset.pattern.permute.xlu0 1
    %63 = vperm.xlu0 %62, %v46
    %v64 = vpop.permute.xlu0 %63
    %v66 = vlaneseq
    %v67 = vshrl.u32 %v66, 7
    %v68 = vsub.s32 4, %v67
    %v69 = vrot.slane %v44, %v68
    %v70 = vmul.f32 %v64, %v69
    %v71 = vadd.f32 %v61, %v70
    %72 = vset.pattern.permute.xlu0 2
    %73 = vperm.xlu0 %72, %v46
    %v74 = vpop.permute.xlu0 %73
    %v76 = vlaneseq
    %v77 = vshrl.u32 %v76, 7
    %v78 = vsub.s32 5, %v77
    %v79 = vrot.slane %v44, %v78
    %v80 = vmul.f32 %v74, %v79
    %v81 = vadd.f32 %v71, %v80
    %v82 = vmul.f32 %v44, %v44
    %vm83 = vcmask 1041408
    %v84 = vsel %vm83, %v82, 0.0
    %v85 = vrot.slane %v84, 4
    %v86 = vadd.f32 %v84, %v85
    %v87 = vrot.slane %v86, 2
    %v88 = vadd.f32 %v86, %v87
    %v89 = vrot.slane %v88, 1
    %v90 = vadd.f32 %v88, %v89
    %v91 = vrsqrt.pop %v90
    %v92 = vmul.f32 %v90, %v91
    %vm93 = vcmp.eq.f32.partialorder %v90, inf
    %v94 = vsel %vm93, %v90, %v92
    %vm95 = vcmp.eq.f32.partialorder %v90, 0.0
    %v96 = vand.u32 %v90, 2147483648
    %v97 = vsel %vm95, %v96, %v94
    %v98 = vadd.f32 %v97, 1e-08
    %v99 = vrcp.pop %v98
    %v100 = vmul.f32 %v44, %v99
    %v101 = vmul.f32 %v81, %v100
    %v102 = vsel %vm83, %v101, 0.0
    %v103 = vrot.slane %v102, 4
    %v104 = vadd.f32 %v102, %v103
    %v105 = vrot.slane %v104, 2
    %v106 = vadd.f32 %v104, %v105
    %v107 = vrot.slane %v106, 1
    %v108 = vadd.f32 %v106, %v107
    %v109 = vmul.f32 %v108, %v100
    %v110 = vsub.f32 %v81, %v109
    %v111 = vmul.f32 %v110, %v110
    %v112 = vsel %vm83, %v111, 0.0
    %v113 = vrot.slane %v112, 4
    %v114 = vadd.f32 %v112, %v113
    %v115 = vrot.slane %v114, 2
    %v116 = vadd.f32 %v114, %v115
    %v117 = vrot.slane %v116, 1
    %v118 = vadd.f32 %v116, %v117
    %v119 = vrsqrt.pop %v118
    %v120 = vmul.f32 %v118, %v119
    %vm121 = vcmp.eq.f32.partialorder %v118, inf
    %v122 = vsel %vm121, %v118, %v120
    %vm123 = vcmp.eq.f32.partialorder %v118, 0.0
    %v124 = vand.u32 %v118, 2147483648
    %v125 = vsel %vm123, %v124, %v122
    %v126 = vadd.f32 %v125, 1e-08
    %v127 = vrcp.pop %v126
    %v128 = vmul.f32 %v110, %v127
    %v130 = vrot.slane %v128, 1
    %v132 = vmul.f32 %v100, %v130
    %v133 = vrot.slane %v128, 7
    %v135 = vmul.f32 %v100, %v133
    %v137 = vrot.slane %v135, 1
    %v139 = vsub.f32 %v132, %v137
    %vm140 = vcmp.lt.f32.partialorder %v139, 0.0
    %v141 = vsub.f32 0.0, %v128
    %v142 = vsel %vm140, 1, 0
    %v143 = vlaneseq
    %v144 = vshrl.u32 %v143, 7
    %v145 = vsub.s32 0, %v144
    %v146 = vrot.slane %v142, %v145
    %vm147 = vcmp.eq.s32.totalorder %v146, 1
    %v148 = vsel %vm147, %v141, %v128
    %v149 = vmul.f32 %v100, %v44
    %v150 = vsel %vm83, %v149, 0.0
    %v151 = vrot.slane %v150, 4
    %v152 = vadd.f32 %v150, %v151
    %v153 = vrot.slane %v152, 2
    %v154 = vadd.f32 %v152, %v153
    %v155 = vrot.slane %v154, 1
    %v156 = vadd.f32 %v154, %v155
    %v157 = vmul.f32 %v156, 0.33333334
    %158 = vst [vmem:[#allocation2] sm:$0x1] %v157
    %v159 = vmul.f32 %v148, %v44
    %v160 = vsel %vm83, %v159, 0.0
    %v161 = vrot.slane %v160, 4
    %v162 = vadd.f32 %v160, %v161
    %v163 = vrot.slane %v162, 2
    %v164 = vadd.f32 %v162, %v163
    %v165 = vrot.slane %v164, 1
    %v166 = vadd.f32 %v164, %v165
    %v167 = vmul.f32 %v166, 0.33333334
    %168 = vst [vmem:[#allocation2 + $0x1] sm:$0x1] %v167
    %v169 = vmul.f32 %v44, 0.33333334
    %170 = vst [vmem:[#allocation2] sm:$0x4] %v169
    %v171 = vmul.f32 %v108, 0.14285715
    %172 = vst [vmem:[#allocation2 + $0x3] sm:$0x1] %v171
    %v173 = vmul.f32 %v148, %v81
    %v174 = vsel %vm83, %v173, 0.0
    %v175 = vrot.slane %v174, 4
    %v176 = vadd.f32 %v174, %v175
    %v177 = vrot.slane %v176, 2
    %v178 = vadd.f32 %v176, %v177
    %v179 = vrot.slane %v178, 1
    %v180 = vadd.f32 %v178, %v179
    %v181 = vmul.f32 %v180, 0.14285715
    %182 = vst [vmem:[#allocation2 + $0x4] sm:$0x1] %v181
    %v183 = vmul.f32 %v81, 0.14285715
    %184 = vst [vmem:[#allocation2 + $0x3] sm:$0x4] %v183
    %v185 = vld [vmem:[#allocation2] sm:$0xff]
    %v186 = vld [vmem:[#allocation6 + $0x8] sm:$0xff]
    %v187 = vld [vmem:[#allocation6 + $0x10] sm:$0xff]
    %v188 = vld [vmem:[#allocation6 + $0x18] sm:$0xff]
    %v189 = vld [vmem:[#allocation6 + $0x20] sm:$0xff]
    %v190 = vpack.c.bf16 %v187, %v186
    %v191 = vpack.c.bf16 %v189, %v188
    %v192 = vpack.c.bf16 %v185, %v185
    %194 = vset.pattern.permute.xlu0 32
    %195 = vperm.xlu0 %194, %v186
    %v196 = vpop.permute.xlu0 %195
    %199 = vset.pattern.permute.xlu0 32
    %200 = vperm.xlu0 %199, %v187
    %v201 = vpop.permute.xlu0 %200
    %204 = vset.pattern.permute.xlu0 32
    %205 = vperm.xlu0 %204, %v188
    %v206 = vpop.permute.xlu0 %205
    %209 = vset.pattern.permute.xlu0 32
    %210 = vperm.xlu0 %209, %v189
    %v211 = vpop.permute.xlu0 %210
    %vm213 = vcmask 64512
    %v215 = vsel %vm213, %v190, 0
    %v218 = vsel %vm213, %v191, 0
    %vm220 = vcmask 1043456
    %v222 = vsel %vm220, %v192, 0
    %224 = vmatprep.subr.bf16.mxu0 0
    %225 = vmatpush1.bf16.msra.mxu0 %v222
    %226 = vmatprep.subr.bf16.mxu0 0
    %227 = vmatpush1.bf16.msra.mxu0 0
    %228 = vmatprep.subr.bf16.mxu0 0
    %229 = vmatpush1.bf16.msra.mxu0 0
    %230 = vmatprep.subr.bf16.mxu0 0
    %231 = vmatpush1.bf16.msra.mxu0 0
    %232 = vmatprep.subr.bf16.mxu0 0
    %233 = vmatpush1.bf16.msra.mxu0 0
    %234 = vmatprep.subr.bf16.mxu0 0
    %235 = vmatpush1.bf16.msra.mxu0 0
    %236 = vmatprep.subr.bf16.mxu0 0
    %237 = vmatpush1.bf16.msra.mxu0 0
    %238 = vmatprep.subr.bf16.mxu0 0
    %239 = vmatpush1.bf16.msra.mxu0 0
    %240 = vmatprep.subr.bf16.mxu0 0
    %241 = vmatpush1.bf16.msra.mxu0 0
    %242 = vmatprep.subr.bf16.mxu0 0
    %243 = vmatpush1.bf16.msra.mxu0 0
    %244 = vmatprep.subr.bf16.mxu0 0
    %245 = vmatpush1.bf16.msra.mxu0 0
    %246 = vmatprep.subr.bf16.mxu0 0
    %247 = vmatpush1.bf16.msra.mxu0 0
    %248 = vmatprep.subr.bf16.mxu0 0
    %249 = vmatpush1.bf16.msra.mxu0 0
    %250 = vmatprep.subr.bf16.mxu0 0
    %251 = vmatpush1.bf16.msra.mxu0 0
    %252 = vmatprep.subr.bf16.mxu0 0
    %253 = vmatpush1.bf16.msra.mxu0 0
    %254 = vmatprep.subr.bf16.mxu0 0
    %255 = vmatpush1.bf16.msra.mxu0 0
    %256 = vmatprep.mubr.bf16.mxu0 0
    %257 = vmatmul.mubr.bf16.gmra.mrb[0].mxu0 %v215
    %v258 = vpop.f32.mrb[0].mxu0
    %v259 = vadd.f32 %v196, %v258
    %v260 = vpop.f32.mrb[0].mxu0
    %v261 = vpop.f32.mrb[0].mxu0
    %v262 = vadd.f32 %v201, %v261
    %v263 = vpop.f32.mrb[0].mxu0
    %264 = vmatprep.mubr.bf16.mxu0 0
    %265 = vmatmul.mubr.bf16.gmra.mrb[0].mxu0 %v218
    %v266 = vpop.f32.mrb[0].mxu0
    %v267 = vadd.f32 %v206, %v266
    %v268 = vpop.f32.mrb[0].mxu0
    %v269 = vpop.f32.mrb[0].mxu0
    %v270 = vadd.f32 %v211, %v269
    %v271 = vpop.f32.mrb[0].mxu0
    %272 = vdwg.mxu0
    %vm273 = vcmp.ge.f32.partialorder %v259, 0.0
    %vm274 = vcmp.ge.f32.partialorder %v262, 0.0
    %vm275 = vcmp.ge.f32.partialorder %v267, 0.0
    %vm276 = vcmp.ge.f32.partialorder %v270, 0.0
    %v277 = vmul.f32 %v259, 0.01
    %v278 = vmul.f32 %v262, 0.01
    %v279 = vmul.f32 %v267, 0.01
    %v280 = vmul.f32 %v270, 0.01
    %v281 = vsel %vm273, %v259, %v277
    %v282 = vsel %vm274, %v262, %v278
    %v283 = vsel %vm275, %v267, %v279
    %v284 = vsel %vm276, %v270, %v280
    %v285 = vld [vmem:[#allocation6 + $0x28] sm:$0xff]
    %v286 = vld [vmem:[#allocation6 + $0x30] sm:$0xff]
    %v287 = vld [vmem:[#allocation6 + $0x38] sm:$0xff]
    %v288 = vld [vmem:[#allocation6 + $0x40] sm:$0xff]
    %v289 = vpack.c.bf16 %v286, %v285
    %v290 = vpack.c.bf16 %v288, %v287
    %v291 = vpack.c.bf16 %v282, %v281
    %v292 = vpack.c.bf16 %v284, %v283
    %294 = vset.pattern.permute.xlu0 32
    %295 = vperm.xlu0 %294, %v285
    %v296 = vpop.permute.xlu0 %295
    %299 = vset.pattern.permute.xlu0 32
    %300 = vperm.xlu0 %299, %v286
    %v301 = vpop.permute.xlu0 %300
    %304 = vset.pattern.permute.xlu0 32
    %305 = vperm.xlu0 %304, %v287
    %v306 = vpop.permute.xlu0 %305
    %309 = vset.pattern.permute.xlu0 32
    %310 = vperm.xlu0 %309, %v288
    %v311 = vpop.permute.xlu0 %310
    %vm313 = vcmask 261120
    %v315 = vsel %vm313, %v289, 0
    %v318 = vsel %vm313, %v290, 0
    %320 = vmatprep.subr.bf16.mxu0 0
    %321 = vmatpush1.bf16.msra.mxu0 %v291
    %322 = vmatprep.subr.bf16.mxu0 0
    %323 = vmatpush1.bf16.msra.mxu0 %v292
    %324 = vmatprep.subr.bf16.mxu0 0
    %325 = vmatpush1.bf16.msra.mxu0 0
    %326 = vmatprep.subr.bf16.mxu0 0
    %327 = vmatpush1.bf16.msra.mxu0 0
    %328 = vmatprep.subr.bf16.mxu0 0
    %329 = vmatpush1.bf16.msra.mxu0 0
    %330 = vmatprep.subr.bf16.mxu0 0
    %331 = vmatpush1.bf16.msra.mxu0 0
    %332 = vmatprep.subr.bf16.mxu0 0
    %333 = vmatpush1.bf16.msra.mxu0 0
    %334 = vmatprep.subr.bf16.mxu0 0
    %335 = vmatpush1.bf16.msra.mxu0 0
    %336 = vmatprep.subr.bf16.mxu0 0
    %337 = vmatpush1.bf16.msra.mxu0 0
    %338 = vmatprep.subr.bf16.mxu0 0
    %339 = vmatpush1.bf16.msra.mxu0 0
    %340 = vmatprep.subr.bf16.mxu0 0
    %341 = vmatpush1.bf16.msra.mxu0 0
    %342 = vmatprep.subr.bf16.mxu0 0
    %343 = vmatpush1.bf16.msra.mxu0 0
    %344 = vmatprep.subr.bf16.mxu0 0
    %345 = vmatpush1.bf16.msra.mxu0 0
    %346 = vmatprep.subr.bf16.mxu0 0
    %347 = vmatpush1.bf16.msra.mxu0 0
    %348 = vmatprep.subr.bf16.mxu0 0
    %349 = vmatpush1.bf16.msra.mxu0 0
    %350 = vmatprep.subr.bf16.mxu0 0
    %351 = vmatpush1.bf16.msra.mxu0 0
    %352 = vmatprep.mubr.bf16.mxu0 0
    %353 = vmatmul.mubr.bf16.gmra.mrb[0].mxu0 %v315
    %v354 = vpop.f32.mrb[0].mxu0
    %v355 = vadd.f32 %v296, %v354
    %v356 = vpop.f32.mrb[0].mxu0
    %v357 = vpop.f32.mrb[0].mxu0
    %v358 = vadd.f32 %v301, %v357
    %v359 = vpop.f32.mrb[0].mxu0
    %360 = vmatprep.mubr.bf16.mxu0 0
    %361 = vmatmul.mubr.bf16.gmra.mrb[0].mxu0 %v318
    %v362 = vpop.f32.mrb[0].mxu0
    %v363 = vadd.f32 %v306, %v362
    %v364 = vpop.f32.mrb[0].mxu0
    %v365 = vpop.f32.mrb[0].mxu0
    %v366 = vadd.f32 %v311, %v365
    %v367 = vpop.f32.mrb[0].mxu0
    %368 = vdwg.mxu0
    %vm369 = vcmp.ge.f32.partialorder %v355, 0.0
    %vm370 = vcmp.ge.f32.partialorder %v358, 0.0
    %vm371 = vcmp.ge.f32.partialorder %v363, 0.0
    %vm372 = vcmp.ge.f32.partialorder %v366, 0.0
    %v373 = vmul.f32 %v355, 0.01
    %v374 = vmul.f32 %v358, 0.01
    %v375 = vmul.f32 %v363, 0.01
    %v376 = vmul.f32 %v366, 0.01
    %v377 = vsel %vm369, %v355, %v373
    %v378 = vsel %vm370, %v358, %v374
    %v379 = vsel %vm371, %v363, %v375
    %v380 = vsel %vm372, %v366, %v376
    %v381 = vmul.f32 %v377, %v281
    %v382 = vmul.f32 %v378, %v282
    %v383 = vmul.f32 %v379, %v283
    %v384 = vmul.f32 %v380, %v284
    %v385 = vadd.f32 %v281, %v381
    %v386 = vadd.f32 %v282, %v382
    %v387 = vadd.f32 %v283, %v383
    %v388 = vadd.f32 %v284, %v384
    %v389 = vld [vmem:[#allocation6 + $0x48] sm:$0xff]
    %v390 = vld [vmem:[#allocation6 + $0x50] sm:$0xff]
    %v391 = vld [vmem:[#allocation6 + $0x58] sm:$0xff]
    %v392 = vld [vmem:[#allocation6 + $0x60] sm:$0xff]
    %v393 = vpack.c.bf16 %v390, %v389
    %v394 = vpack.c.bf16 %v392, %v391
    %v395 = vpack.c.bf16 %v386, %v385
    %v396 = vpack.c.bf16 %v388, %v387
    %398 = vset.pattern.permute.xlu0 32
    %399 = vperm.xlu0 %398, %v389
    %v400 = vpop.permute.xlu0 %399
    %403 = vset.pattern.permute.xlu0 32
    %404 = vperm.xlu0 %403, %v390
    %v405 = vpop.permute.xlu0 %404
    %408 = vset.pattern.permute.xlu0 32
    %409 = vperm.xlu0 %408, %v391
    %v410 = vpop.permute.xlu0 %409
    %413 = vset.pattern.permute.xlu0 32
    %414 = vperm.xlu0 %413, %v392
    %v415 = vpop.permute.xlu0 %414
    %v418 = vsel %vm313, %v393, 0
    %v421 = vsel %vm313, %v394, 0
    %423 = vmatprep.subr.bf16.mxu0 0
    %424 = vmatpush1.bf16.msra.mxu0 %v395
    %425 = vmatprep.subr.bf16.mxu0 0
    %426 = vmatpush1.bf16.msra.mxu0 %v396
    %427 = vmatprep.subr.bf16.mxu0 0
    %428 = vmatpush1.bf16.msra.mxu0 0
    %429 = vmatprep.subr.bf16.mxu0 0
    %430 = vmatpush1.bf16.msra.mxu0 0
    %431 = vmatprep.subr.bf16.mxu0 0
    %432 = vmatpush1.bf16.msra.mxu0 0
    %433 = vmatprep.subr.bf16.mxu0 0
    %434 = vmatpush1.bf16.msra.mxu0 0
    %435 = vmatprep.subr.bf16.mxu0 0
    %436 = vmatpush1.bf16.msra.mxu0 0
    %437 = vmatprep.subr.bf16.mxu0 0
    %438 = vmatpush1.bf16.msra.mxu0 0
    %439 = vmatprep.subr.bf16.mxu0 0
    %440 = vmatpush1.bf16.msra.mxu0 0
    %441 = vmatprep.subr.bf16.mxu0 0
    %442 = vmatpush1.bf16.msra.mxu0 0
    %443 = vmatprep.subr.bf16.mxu0 0
    %444 = vmatpush1.bf16.msra.mxu0 0
    %445 = vmatprep.subr.bf16.mxu0 0
    %446 = vmatpush1.bf16.msra.mxu0 0
    %447 = vmatprep.subr.bf16.mxu0 0
    %448 = vmatpush1.bf16.msra.mxu0 0
    %449 = vmatprep.subr.bf16.mxu0 0
    %450 = vmatpush1.bf16.msra.mxu0 0
    %451 = vmatprep.subr.bf16.mxu0 0
    %452 = vmatpush1.bf16.msra.mxu0 0
    %453 = vmatprep.subr.bf16.mxu0 0
    %454 = vmatpush1.bf16.msra.mxu0 0
    %455 = vmatprep.mubr.bf16.mxu0 0
    %456 = vmatmul.mubr.bf16.gmra.mrb[0].mxu0 %v418
    %v457 = vpop.f32.mrb[0].mxu0
    %v458 = vadd.f32 %v400, %v457
    %v459 = vpop.f32.mrb[0].mxu0
    %v460 = vpop.f32.mrb[0].mxu0
    %v461 = vadd.f32 %v405, %v460
    %v462 = vpop.f32.mrb[0].mxu0
    %463 = vmatprep.mubr.bf16.mxu0 0
    %464 = vmatmul.mubr.bf16.gmra.mrb[0].mxu0 %v421
    %v465 = vpop.f32.mrb[0].mxu0
    %v466 = vadd.f32 %v410, %v465
    %v467 = vpop.f32.mrb[0].mxu0
    %v468 = vpop.f32.mrb[0].mxu0
    %v469 = vadd.f32 %v415, %v468
    %v470 = vpop.f32.mrb[0].mxu0
    %471 = vdwg.mxu0
    %vm472 = vcmp.ge.f32.partialorder %v458, 0.0
    %vm473 = vcmp.ge.f32.partialorder %v461, 0.0
    %vm474 = vcmp.ge.f32.partialorder %v466, 0.0
    %vm475 = vcmp.ge.f32.partialorder %v469, 0.0
    %v476 = vmul.f32 %v458, 0.01
    %v477 = vmul.f32 %v461, 0.01
    %v478 = vmul.f32 %v466, 0.01
    %v479 = vmul.f32 %v469, 0.01
    %v480 = vsel %vm472, %v458, %v476
    %v481 = vsel %vm473, %v461, %v477
    %v482 = vsel %vm474, %v466, %v478
    %v483 = vsel %vm475, %v469, %v479
    %v484 = vld [vmem:[#allocation6 + $0x68] sm:$0x3f]
    %v485 = vpack.c.bf16 %v484, %v484
    %v486 = vpack.c.bf16 %v481, %v480
    %v487 = vpack.c.bf16 %v483, %v482
    %489 = vset.pattern.permute.xlu0 32
    %490 = vperm.xlu0 %489, %v484
    %v491 = vpop.permute.xlu0 %490
    %v494 = vsel %vm313, %v485, 0
    %496 = vmatprep.subr.bf16.mxu0 0
    %497 = vmatpush1.bf16.msra.mxu0 %v486
    %498 = vmatprep.subr.bf16.mxu0 0
    %499 = vmatpush1.bf16.msra.mxu0 %v487
    %500 = vmatprep.subr.bf16.mxu0 0
    %501 = vmatpush1.bf16.msra.mxu0 0
    %502 = vmatprep.subr.bf16.mxu0 0
    %503 = vmatpush1.bf16.msra.mxu0 0
    %504 = vmatprep.subr.bf16.mxu0 0
    %505 = vmatpush1.bf16.msra.mxu0 0
    %506 = vmatprep.subr.bf16.mxu0 0
    %507 = vmatpush1.bf16.msra.mxu0 0
    %508 = vmatprep.subr.bf16.mxu0 0
    %509 = vmatpush1.bf16.msra.mxu0 0
    %510 = vmatprep.subr.bf16.mxu0 0
    %511 = vmatpush1.bf16.msra.mxu0 0
    %512 = vmatprep.subr.bf16.mxu0 0
    %513 = vmatpush1.bf16.msra.mxu0 0
    %514 = vmatprep.subr.bf16.mxu0 0
    %515 = vmatpush1.bf16.msra.mxu0 0
    %516 = vmatprep.subr.bf16.mxu0 0
    %517 = vmatpush1.bf16.msra.mxu0 0
    %518 = vmatprep.subr.bf16.mxu0 0
    %519 = vmatpush1.bf16.msra.mxu0 0
    %520 = vmatprep.subr.bf16.mxu0 0
    %521 = vmatpush1.bf16.msra.mxu0 0
    %522 = vmatprep.subr.bf16.mxu0 0
    %523 = vmatpush1.bf16.msra.mxu0 0
    %524 = vmatprep.subr.bf16.mxu0 0
    %525 = vmatpush1.bf16.msra.mxu0 0
    %526 = vmatprep.subr.bf16.mxu0 0
    %527 = vmatpush1.bf16.msra.mxu0 0
    %528 = vmatprep.mubr.bf16.mxu0 0
    %529 = vmatmul.mubr.bf16.gmra.mrb[0].mxu0 %v494
    %v530 = vpop.f32.mrb[0].mxu0
    %v531 = vadd.f32 %v491, %v530
    %v532 = vpop.f32.mrb[0].mxu0
    %v533 = vpop.f32.mrb[0].mxu0
    %v534 = vpop.f32.mrb[0].mxu0
    %535 = vdwg.mxu0
    %v536 = vmul.f32 %v531, 3.0
    %v537 = vlaneseq
    %v538 = vshrl.u32 %v537, 7
    %v539 = vsub.s32 0, %v538
    %v540 = vrot.slane %v536, %v539
    %v541 = vmul.f32 %v540, %v100
    %v542 = vlaneseq
    %v543 = vshrl.u32 %v542, 7
    %v544 = vsub.s32 1, %v543
    %v545 = vrot.slane %v536, %v544
    %v546 = vmul.f32 %v545, %v148
    %v547 = vadd.f32 %v541, %v546
    %v548 = vsel %vm83, %v547, %v536
    %v549 = vmul.f32 %v531, 7.0
    %v550 = vlaneseq
    %v551 = vshrl.u32 %v550, 7
    %v552 = vsub.s32 3, %v551
    %v553 = vrot.slane %v549, %v552
    %v554 = vmul.f32 %v553, %v100
    %v555 = vlaneseq
    %v556 = vshrl.u32 %v555, 7
    %v557 = vsub.s32 4, %v556
    %v558 = vrot.slane %v549, %v557
    %v559 = vmul.f32 %v558, %v148
    %v560 = vadd.f32 %v554, %v559
    %v562 = vrot.slane %v549, 3
    %v564 = vsel %vm83, %v560, %v562
    %v565 = vstv %s42
    %vm566 = vcmp.lt.f32.partialorder %v44, %v565
    %vm567 = vcmp.lt.f32.partialorder %v44, 0.0
    %v568 = vsel %vm567, 1, 0
    %v569 = vrot.slane %v568, 4
    %vm570 = vcmp.ne.s32.totalorder %v569, 0
    %vm571 = vmand %vm566, %vm570
    %v572 = vsel %vm571, 1, 0
    %v573 = vlaneseq
    %v574 = vshrl.u32 %v573, 7
    %v575 = vsub.s32 6, %v574
    %v576 = vrot.slane %v572, %v575
    %vm577 = vcmp.eq.s32.totalorder %v576, 1
    %v578 = vsel %vm577, %v548, %v44
    %v580 = vrot.slane %v44, 3
    %v582 = vsel %vm577, %v564, %v580
    %v583 = vld [vmem:[#allocation6 + $0x70] sm:$0x7]
    %585 = vset.pattern.permute.xlu0 0
    %586 = vperm.xlu0 %585, %v583
    %v587 = vpop.permute.xlu0 %586
    %v589 = vlaneseq
    %v590 = vshrl.u32 %v589, 7
    %v591 = vsub.s32 0, %v590
    %v592 = vrot.slane %v582, %v591
    %v593 = vmul.f32 %v587, %v592
    %594 = vset.pattern.permute.xlu0 32
    %595 = vperm.xlu0 %594, %v583
    %v596 = vpop.permute.xlu0 %595
    %v598 = vadd.f32 %v596, %v593
    %599 = vset.pattern.permute.xlu0 1
    %600 = vperm.xlu0 %599, %v583
    %v601 = vpop.permute.xlu0 %600
    %v603 = vlaneseq
    %v604 = vshrl.u32 %v603, 7
    %v605 = vsub.s32 1, %v604
    %v606 = vrot.slane %v582, %v605
    %v607 = vmul.f32 %v601, %v606
    %v608 = vadd.f32 %v598, %v607
    %609 = vset.pattern.permute.xlu0 2
    %610 = vperm.xlu0 %609, %v583
    %v611 = vpop.permute.xlu0 %610
    %v613 = vlaneseq
    %v614 = vshrl.u32 %v613, 7
    %v615 = vsub.s32 2, %v614
    %v616 = vrot.slane %v582, %v615
    %v617 = vmul.f32 %v611, %v616
    %v618 = vadd.f32 %v608, %v617
    %v619 = vmul.f32 %v578, %v578
    %vm620 = vcmask 1042432
    %v621 = vsel %vm620, %v619, 0.0
    %v622 = vrot.slane %v621, 4
    %v623 = vadd.f32 %v621, %v622
    %v624 = vrot.slane %v623, 2
    %v625 = vadd.f32 %v623, %v624
    %v626 = vrot.slane %v625, 1
    %v627 = vadd.f32 %v625, %v626
    %v628 = vrsqrt.pop %v627
    %v629 = vmul.f32 %v627, %v628
    %vm630 = vcmp.eq.f32.partialorder %v627, inf
    %v631 = vsel %vm630, %v627, %v629
    %vm632 = vcmp.eq.f32.partialorder %v627, 0.0
    %v633 = vand.u32 %v627, 2147483648
    %v634 = vsel %vm632, %v633, %v631
    %v635 = vadd.f32 %v634, 1e-08
    %v636 = vrcp.pop %v635
    %v637 = vmul.f32 %v578, %v636
    %v638 = vmul.f32 %v618, %v637
    %v639 = vsel %vm620, %v638, 0.0
    %v640 = vrot.slane %v639, 4
    %v641 = vadd.f32 %v639, %v640
    %v642 = vrot.slane %v641, 2
    %v643 = vadd.f32 %v641, %v642
    %v644 = vrot.slane %v643, 1
    %v645 = vadd.f32 %v643, %v644
    %v646 = vmul.f32 %v645, %v637
    %v647 = vsub.f32 %v618, %v646
    %v648 = vmul.f32 %v647, %v647
    %v649 = vsel %vm620, %v648, 0.0
    %v650 = vrot.slane %v649, 4
    %v651 = vadd.f32 %v649, %v650
    %v652 = vrot.slane %v651, 2
    %v653 = vadd.f32 %v651, %v652
    %v654 = vrot.slane %v653, 1
    %v655 = vadd.f32 %v653, %v654
    %v656 = vrsqrt.pop %v655
    %v657 = vmul.f32 %v655, %v656
    %vm658 = vcmp.eq.f32.partialorder %v655, inf
    %v659 = vsel %vm658, %v655, %v657
    %vm660 = vcmp.eq.f32.partialorder %v655, 0.0
    %v661 = vand.u32 %v655, 2147483648
    %v662 = vsel %vm660, %v661, %v659
    %v663 = vadd.f32 %v662, 1e-08
    %v664 = vrcp.pop %v663
    %v665 = vmul.f32 %v647, %v664
    %v667 = vrot.slane %v665, 1
    %v669 = vmul.f32 %v637, %v667
    %v670 = vrot.slane %v665, 7
    %v672 = vmul.f32 %v637, %v670
    %v674 = vrot.slane %v672, 1
    %v676 = vsub.f32 %v669, %v674
    %v677 = vrot.slane %v665, 6
    %v679 = vmul.f32 %v637, %v677
    %v680 = vrot.slane %v665, 2
    %v682 = vmul.f32 %v637, %v680
    %v684 = vrot.slane %v682, 6
    %v686 = vsub.f32 %v679, %v684
    %v688 = vrot.slane %v676, 1
    %v691 = vrot.slane %v686, 1
    %v693 = vrot.slane %v676, 6
    %vm695 = vcmask 1040384
    %v696 = vsel %vm695, %v688, %v691
    %v697 = vsel %vm83, %v696, %v693
    %v698 = vmul.f32 %v637, %v578
    %v699 = vsel %vm620, %v698, 0.0
    %v700 = vrot.slane %v699, 4
    %v701 = vadd.f32 %v699, %v700
    %v702 = vrot.slane %v701, 2
    %v703 = vadd.f32 %v701, %v702
    %v704 = vrot.slane %v703, 1
    %v705 = vadd.f32 %v703, %v704
    %706 = vst [vmem:[#allocation2] sm:$0x1] %v705
    %707 = vst [vmem:[#allocation2 + $0x1] sm:$0x1] %v645
    %v708 = vmul.f32 %v665, %v618
    %v709 = vsel %vm620, %v708, 0.0
    %v710 = vrot.slane %v709, 4
    %v711 = vadd.f32 %v709, %v710
    %v712 = vrot.slane %v711, 2
    %v713 = vadd.f32 %v711, %v712
    %v714 = vrot.slane %v713, 1
    %v715 = vadd.f32 %v713, %v714
    %716 = vst [vmem:[#allocation2 + $0x2] sm:$0x1] %v715
    %v717 = vld [vmem:[#allocation2] sm:$0xff]
    %v718 = vld [vmem:[#allocation6 + $0x78] sm:$0xff]
    %v719 = vld [vmem:[#allocation6 + $0x80] sm:$0xff]
    %v720 = vld [vmem:[#allocation6 + $0x88] sm:$0xff]
    %v721 = vld [vmem:[#allocation6 + $0x90] sm:$0xff]
    %v722 = vpack.c.bf16 %v719, %v718
    %v723 = vpack.c.bf16 %v721, %v720
    %v724 = vpack.c.bf16 %v717, %v717
    %726 = vset.pattern.permute.xlu0 32
    %727 = vperm.xlu0 %726, %v718
    %v728 = vpop.permute.xlu0 %727
    %731 = vset.pattern.permute.xlu0 32
    %732 = vperm.xlu0 %731, %v719
    %v733 = vpop.permute.xlu0 %732
    %736 = vset.pattern.permute.xlu0 32
    %737 = vperm.xlu0 %736, %v720
    %v738 = vpop.permute.xlu0 %737
    %741 = vset.pattern.permute.xlu0 32
    %742 = vperm.xlu0 %741, %v721
    %v743 = vpop.permute.xlu0 %742
    %v746 = vsel %vm213, %v722, 0
    %v749 = vsel %vm213, %v723, 0
    %v752 = vsel %vm220, %v724, 0
    %754 = vmatprep.subr.bf16.mxu0 0
    %755 = vmatpush1.bf16.msra.mxu0 %v752
    %756 = vmatprep.subr.bf16.mxu0 0
    %757 = vmatpush1.bf16.msra.mxu0 0
    %758 = vmatprep.subr.bf16.mxu0 0
    %759 = vmatpush1.bf16.msra.mxu0 0
    %760 = vmatprep.subr.bf16.mxu0 0
    %761 = vmatpush1.bf16.msra.mxu0 0
    %762 = vmatprep.subr.bf16.mxu0 0
    %763 = vmatpush1.bf16.msra.mxu0 0
    %764 = vmatprep.subr.bf16.mxu0 0
    %765 = vmatpush1.bf16.msra.mxu0 0
    %766 = vmatprep.subr.bf16.mxu0 0
    %767 = vmatpush1.bf16.msra.mxu0 0
    %768 = vmatprep.subr.bf16.mxu0 0
    %769 = vmatpush1.bf16.msra.mxu0 0
    %770 = vmatprep.subr.bf16.mxu0 0
    %771 = vmatpush1.bf16.msra.mxu0 0
    %772 = vmatprep.subr.bf16.mxu0 0
    %773 = vmatpush1.bf16.msra.mxu0 0
    %774 = vmatprep.subr.bf16.mxu0 0
    %775 = vmatpush1.bf16.msra.mxu0 0
    %776 = vmatprep.subr.bf16.mxu0 0
    %777 = vmatpush1.bf16.msra.mxu0 0
    %778 = vmatprep.subr.bf16.mxu0 0
    %779 = vmatpush1.bf16.msra.mxu0 0
    %780 = vmatprep.subr.bf16.mxu0 0
    %781 = vmatpush1.bf16.msra.mxu0 0
    %782 = vmatprep.subr.bf16.mxu0 0
    %783 = vmatpush1.bf16.msra.mxu0 0
    %784 = vmatprep.subr.bf16.mxu0 0
    %785 = vmatpush1.bf16.msra.mxu0 0
    %786 = vmatprep.mubr.bf16.mxu0 0
    %787 = vmatmul.mubr.bf16.gmra.mrb[0].mxu0 %v746
    %v788 = vpop.f32.mrb[0].mxu0
    %v789 = vadd.f32 %v728, %v788
    %v790 = vpop.f32.mrb[0].mxu0
    %v791 = vpop.f32.mrb[0].mxu0
    %v792 = vadd.f32 %v733, %v791
    %v793 = vpop.f32.mrb[0].mxu0
    %794 = vmatprep.mubr.bf16.mxu0 0
    %795 = vmatmul.mubr.bf16.gmra.mrb[0].mxu0 %v749
    %v796 = vpop.f32.mrb[0].mxu0
    %v797 = vadd.f32 %v738, %v796
    %v798 = vpop.f32.mrb[0].mxu0
    %v799 = vpop.f32.mrb[0].mxu0
    %v800 = vadd.f32 %v743, %v799
    %v801 = vpop.f32.mrb[0].mxu0
    %802 = vdwg.mxu0
    %vm803 = vcmp.ge.f32.partialorder %v789, 0.0
    %vm804 = vcmp.ge.f32.partialorder %v792, 0.0
    %vm805 = vcmp.ge.f32.partialorder %v797, 0.0
    %vm806 = vcmp.ge.f32.partialorder %v800, 0.0
    %v807 = vmul.f32 %v789, 0.01
    %v808 = vmul.f32 %v792, 0.01
    %v809 = vmul.f32 %v797, 0.01
    %v810 = vmul.f32 %v800, 0.01
    %v811 = vsel %vm803, %v789, %v807
    %v812 = vsel %vm804, %v792, %v808
    %v813 = vsel %vm805, %v797, %v809
    %v814 = vsel %vm806, %v800, %v810
    %v815 = vld [vmem:[#allocation6 + $0x98] sm:$0xff]
    %v816 = vld [vmem:[#allocation6 + $0xa0] sm:$0xff]
    %v817 = vld [vmem:[#allocation6 + $0xa8] sm:$0xff]
    %v818 = vld [vmem:[#allocation6 + $0xb0] sm:$0xff]
    %v819 = vpack.c.bf16 %v816, %v815
    %v820 = vpack.c.bf16 %v818, %v817
    %v821 = vpack.c.bf16 %v812, %v811
    %v822 = vpack.c.bf16 %v814, %v813
    %824 = vset.pattern.permute.xlu0 32
    %825 = vperm.xlu0 %824, %v815
    %v826 = vpop.permute.xlu0 %825
    %829 = vset.pattern.permute.xlu0 32
    %830 = vperm.xlu0 %829, %v816
    %v831 = vpop.permute.xlu0 %830
    %834 = vset.pattern.permute.xlu0 32
    %835 = vperm.xlu0 %834, %v817
    %v836 = vpop.permute.xlu0 %835
    %839 = vset.pattern.permute.xlu0 32
    %840 = vperm.xlu0 %839, %v818
    %v841 = vpop.permute.xlu0 %840
    %v844 = vsel %vm313, %v819, 0
    %v847 = vsel %vm313, %v820, 0
    %849 = vmatprep.subr.bf16.mxu0 0
    %850 = vmatpush1.bf16.msra.mxu0 %v821
    %851 = vmatprep.subr.bf16.mxu0 0
    %852 = vmatpush1.bf16.msra.mxu0 %v822
    %853 = vmatprep.subr.bf16.mxu0 0
    %854 = vmatpush1.bf16.msra.mxu0 0
    %855 = vmatprep.subr.bf16.mxu0 0
    %856 = vmatpush1.bf16.msra.mxu0 0
    %857 = vmatprep.subr.bf16.mxu0 0
    %858 = vmatpush1.bf16.msra.mxu0 0
    %859 = vmatprep.subr.bf16.mxu0 0
    %860 = vmatpush1.bf16.msra.mxu0 0
    %861 = vmatprep.subr.bf16.mxu0 0
    %862 = vmatpush1.bf16.msra.mxu0 0
    %863 = vmatprep.subr.bf16.mxu0 0
    %864 = vmatpush1.bf16.msra.mxu0 0
    %865 = vmatprep.subr.bf16.mxu0 0
    %866 = vmatpush1.bf16.msra.mxu0 0
    %867 = vmatprep.subr.bf16.mxu0 0
    %868 = vmatpush1.bf16.msra.mxu0 0
    %869 = vmatprep.subr.bf16.mxu0 0
    %870 = vmatpush1.bf16.msra.mxu0 0
    %871 = vmatprep.subr.bf16.mxu0 0
    %872 = vmatpush1.bf16.msra.mxu0 0
    %873 = vmatprep.subr.bf16.mxu0 0
    %874 = vmatpush1.bf16.msra.mxu0 0
    %875 = vmatprep.subr.bf16.mxu0 0
    %876 = vmatpush1.bf16.msra.mxu0 0
    %877 = vmatprep.subr.bf16.mxu0 0
    %878 = vmatpush1.bf16.msra.mxu0 0
    %879 = vmatprep.subr.bf16.mxu0 0
    %880 = vmatpush1.bf16.msra.mxu0 0
    %881 = vmatprep.mubr.bf16.mxu0 0
    %882 = vmatmul.mubr.bf16.gmra.mrb[0].mxu0 %v844
    %v883 = vpop.f32.mrb[0].mxu0
    %v884 = vadd.f32 %v826, %v883
    %v885 = vpop.f32.mrb[0].mxu0
    %v886 = vpop.f32.mrb[0].mxu0
    %v887 = vadd.f32 %v831, %v886
    %v888 = vpop.f32.mrb[0].mxu0
    %889 = vmatprep.mubr.bf16.mxu0 0
    %890 = vmatmul.mubr.bf16.gmra.mrb[0].mxu0 %v847
    %v891 = vpop.f32.mrb[0].mxu0
    %v892 = vadd.f32 %v836, %v891
    %v893 = vpop.f32.mrb[0].mxu0
    %v894 = vpop.f32.mrb[0].mxu0
    %v895 = vadd.f32 %v841, %v894
    %v896 = vpop.f32.mrb[0].mxu0
    %897 = vdwg.mxu0
    %vm898 = vcmp.ge.f32.partialorder %v884, 0.0
    %vm899 = vcmp.ge.f32.partialorder %v887, 0.0
    %vm900 = vcmp.ge.f32.partialorder %v892, 0.0
    %vm901 = vcmp.ge.f32.partialorder %v895, 0.0
    %v902 = vmul.f32 %v884, 0.01
    %v903 = vmul.f32 %v887, 0.01
    %v904 = vmul.f32 %v892, 0.01
    %v905 = vmul.f32 %v895, 0.01
    %v906 = vsel %vm898, %v884, %v902
    %v907 = vsel %vm899, %v887, %v903
    %v908 = vsel %vm900, %v892, %v904
    %v909 = vsel %vm901, %v895, %v905
    %v910 = vmul.f32 %v906, %v811
    %v911 = vmul.f32 %v907, %v812
    %v912 = vmul.f32 %v908, %v813
    %v913 = vmul.f32 %v909, %v814
    %v914 = vld [vmem:[#allocation6 + $0xb8] sm:$0xff]
    %v915 = vld [vmem:[#allocation6 + $0xc0] sm:$0xff]
    %v916 = vld [vmem:[#allocation6 + $0xc8] sm:$0xff]
    %v917 = vld [vmem:[#allocation6 + $0xd0] sm:$0xff]
    %v918 = vpack.c.bf16 %v915, %v914
    %v919 = vpack.c.bf16 %v917, %v916
    %v920 = vpack.c.bf16 %v911, %v910
    %v921 = vpack.c.bf16 %v913, %v912
    %923 = vset.pattern.permute.xlu0 32
    %924 = vperm.xlu0 %923, %v914
    %v925 = vpop.permute.xlu0 %924
    %928 = vset.pattern.permute.xlu0 32
    %929 = vperm.xlu0 %928, %v915
    %v930 = vpop.permute.xlu0 %929
    %933 = vset.pattern.permute.xlu0 32
    %934 = vperm.xlu0 %933, %v916
    %v935 = vpop.permute.xlu0 %934
    %938 = vset.pattern.permute.xlu0 32
    %939 = vperm.xlu0 %938, %v917
    %v940 = vpop.permute.xlu0 %939
    %v943 = vsel %vm313, %v918, 0
    %v946 = vsel %vm313, %v919, 0
    %948 = vmatprep.subr.bf16.mxu0 0
    %949 = vmatpush1.bf16.msra.mxu0 %v920
    %950 = vmatprep.subr.bf16.mxu0 0
    %951 = vmatpush1.bf16.msra.mxu0 %v921
    %952 = vmatprep.subr.bf16.mxu0 0
    %953 = vmatpush1.bf16.msra.mxu0 0
    %954 = vmatprep.subr.bf16.mxu0 0
    %955 = vmatpush1.bf16.msra.mxu0 0
    %956 = vmatprep.subr.bf16.mxu0 0
    %957 = vmatpush1.bf16.msra.mxu0 0
    %958 = vmatprep.subr.bf16.mxu0 0
    %959 = vmatpush1.bf16.msra.mxu0 0
    %960 = vmatprep.subr.bf16.mxu0 0
    %961 = vmatpush1.bf16.msra.mxu0 0
    %962 = vmatprep.subr.bf16.mxu0 0
    %963 = vmatpush1.bf16.msra.mxu0 0
    %964 = vmatprep.subr.bf16.mxu0 0
    %965 = vmatpush1.bf16.msra.mxu0 0
    %966 = vmatprep.subr.bf16.mxu0 0
    %967 = vmatpush1.bf16.msra.mxu0 0
    %968 = vmatprep.subr.bf16.mxu0 0
    %969 = vmatpush1.bf16.msra.mxu0 0
    %970 = vmatprep.subr.bf16.mxu0 0
    %971 = vmatpush1.bf16.msra.mxu0 0
    %972 = vmatprep.subr.bf16.mxu0 0
    %973 = vmatpush1.bf16.msra.mxu0 0
    %974 = vmatprep.subr.bf16.mxu0 0
    %975 = vmatpush1.bf16.msra.mxu0 0
    %976 = vmatprep.subr.bf16.mxu0 0
    %977 = vmatpush1.bf16.msra.mxu0 0
    %978 = vmatprep.subr.bf16.mxu0 0
    %979 = vmatpush1.bf16.msra.mxu0 0
    %980 = vmatprep.mubr.bf16.mxu0 0
    %981 = vmatmul.mubr.bf16.gmra.mrb[0].mxu0 %v943
    %v982 = vpop.f32.mrb[0].mxu0
    %v983 = vadd.f32 %v925, %v982
    %v984 = vpop.f32.mrb[0].mxu0
    %v985 = vpop.f32.mrb[0].mxu0
    %v986 = vadd.f32 %v930, %v985
    %v987 = vpop.f32.mrb[0].mxu0
    %988 = vmatprep.mubr.bf16.mxu0 0
    %989 = vmatmul.mubr.bf16.gmra.mrb[0].mxu0 %v946
    %v990 = vpop.f32.mrb[0].mxu0
    %v991 = vadd.f32 %v935, %v990
    %v992 = vpop.f32.mrb[0].mxu0
    %v993 = vpop.f32.mrb[0].mxu0
    %v994 = vadd.f32 %v940, %v993
    %v995 = vpop.f32.mrb[0].mxu0
    %996 = vdwg.mxu0
    %vm997 = vcmp.ge.f32.partialorder %v983, 0.0
    %vm998 = vcmp.ge.f32.partialorder %v986, 0.0
    %vm999 = vcmp.ge.f32.partialorder %v991, 0.0
    %vm1000 = vcmp.ge.f32.partialorder %v994, 0.0
    %v1001 = vmul.f32 %v983, 0.01
    %v1002 = vmul.f32 %v986, 0.01
    %v1003 = vmul.f32 %v991, 0.01
    %v1004 = vmul.f32 %v994, 0.01
    %v1005 = vsel %vm997, %v983, %v1001
    %v1006 = vsel %vm998, %v986, %v1002
    %v1007 = vsel %vm999, %v991, %v1003
    %v1008 = vsel %vm1000, %v994, %v1004
    %v1009 = vld [vmem:[#allocation6 + $0xd8] sm:$0x7]
    %v1010 = vpack.c.bf16 %v1009, %v1009
    %v1011 = vpack.c.bf16 %v1006, %v1005
    %v1012 = vpack.c.bf16 %v1008, %v1007
    %1014 = vset.pattern.permute.xlu0 32
    %1015 = vperm.xlu0 %1014, %v1009
    %v1016 = vpop.permute.xlu0 %1015
    %v1019 = vsel %vm313, %v1010, 0
    %1021 = vmatprep.subr.bf16.mxu0 0
    %1022 = vmatpush1.bf16.msra.mxu0 %v1011
    %1023 = vmatprep.subr.bf16.mxu0 0
    %1024 = vmatpush1.bf16.msra.mxu0 %v1012
    %1025 = vmatprep.subr.bf16.mxu0 0
    %1026 = vmatpush1.bf16.msra.mxu0 0
    %1027 = vmatprep.subr.bf16.mxu0 0
    %1028 = vmatpush1.bf16.msra.mxu0 0
    %1029 = vmatprep.subr.bf16.mxu0 0
    %1030 = vmatpush1.bf16.msra.mxu0 0
    %1031 = vmatprep.subr.bf16.mxu0 0
    %1032 = vmatpush1.bf16.msra.mxu0 0
    %1033 = vmatprep.subr.bf16.mxu0 0
    %1034 = vmatpush1.bf16.msra.mxu0 0
    %1035 = vmatprep.subr.bf16.mxu0 0
    %1036 = vmatpush1.bf16.msra.mxu0 0
    %1037 = vmatprep.subr.bf16.mxu0 0
    %1038 = vmatpush1.bf16.msra.mxu0 0
    %1039 = vmatprep.subr.bf16.mxu0 0
    %1040 = vmatpush1.bf16.msra.mxu0 0
    %1041 = vmatprep.subr.bf16.mxu0 0
    %1042 = vmatpush1.bf16.msra.mxu0 0
    %1043 = vmatprep.subr.bf16.mxu0 0
    %1044 = vmatpush1.bf16.msra.mxu0 0
    %1045 = vmatprep.subr.bf16.mxu0 0
    %1046 = vmatpush1.bf16.msra.mxu0 0
    %1047 = vmatprep.subr.bf16.mxu0 0
    %1048 = vmatpush1.bf16.msra.mxu0 0
    %1049 = vmatprep.subr.bf16.mxu0 0
    %1050 = vmatpush1.bf16.msra.mxu0 0
    %1051 = vmatprep.subr.bf16.mxu0 0
    %1052 = vmatpush1.bf16.msra.mxu0 0
    %1053 = vmatprep.mubr.bf16.mxu0 0
    %1054 = vmatmul.mubr.bf16.gmra.mrb[0].mxu0 %v1019
    %v1055 = vpop.f32.mrb[0].mxu0
    %v1056 = vadd.f32 %v1016, %v1055
    %v1057 = vpop.f32.mrb[0].mxu0
    %v1058 = vpop.f32.mrb[0].mxu0
    %v1059 = vpop.f32.mrb[0].mxu0
    %1060 = vdwg.mxu0
    %v1061 = vld [vmem:[#allocation6 + $0xe0] sm:$0x7]
    %v1062 = vlaneseq
    %v1063 = vshrl.u32 %v1062, 7
    %v1064 = vsub.s32 0, %v1063
    %v1065 = vrot.slane %v1056, %v1064
    %v1066 = vmul.f32 %v1065, %v637
    %v1067 = vlaneseq
    %v1068 = vshrl.u32 %v1067, 7
    %v1069 = vsub.s32 1, %v1068
    %v1070 = vrot.slane %v1056, %v1069
    %v1071 = vmul.f32 %v1070, %v665
    %v1072 = vadd.f32 %v1066, %v1071
    %v1073 = vlaneseq
    %v1074 = vshrl.u32 %v1073, 7
    %v1075 = vsub.s32 2, %v1074
    %v1076 = vrot.slane %v1056, %v1075
    %v1077 = vmul.f32 %v1076, %v697
    %v1078 = vadd.f32 %v1072, %v1077
    %1080 = vset.pattern.permute.xlu0 32
    %1081 = vperm.xlu0 %1080, %v1061
    %v1082 = vpop.permute.xlu0 %1081
    %v1084 = vadd.f32 %v1078, %v1082
    %v1085 = vstv %s43
    %v1086 = vmul.f32 %v1084, %v1085
    %v1087 = vadd.f32 %v578, %v1086
    %1088 = vst [vmem:[%s3] sm:$0x7] %v1087
    %1089 = vst [vmem:[%s3 + $0x3] sm:$0x7] %v582
    %1090 = vst [vmem:[%s3 + $0x6] sm:$0x3] 0.0
    // Predicated region
    $region22: #{mnn_forward.1} parent=1 // pred_check
      _
    $region23: #{mnn_forward.1} parent=1 // pred_check_branch
      %1092 = sbr.rel (0) target = $region25
    $region24: #{mnn_forward.1} parent=1 // pred_region
      _
    $region25: #{mnn_forward.1} parent=1 // pred_fallthru
      _
    // Predicated region
    $region26: #{mnn_forward.1} parent=1 // pred_check
      _
    $region27: #{mnn_forward.1} parent=1 // pred_check_branch
      %1094 = sbr.rel (0) target = $region29
    $region28: #{mnn_forward.1} parent=1 // pred_region
      _
    $region29: #{mnn_forward.1} parent=1 // pred_fallthru
      _
    %1095 = vsyncpa [#allocation4], 1
    %1096 = vsyncpa [#allocation5], 1

</llo_original>
